<compile_context>
chip_gen: v6e
topology: v6e:2x2x1
jax: 0.10.0
libtpu: 0.0.40
codegen_flags: <defaults>
</compile_context>

<pallas_src>
import numpy as np
import jax
import jax.numpy as jnp
from jax import lax
from jax.experimental import pallas as pl
from jax.experimental.pallas import tpu as pltpu

LANES = 128  # TPU lane width; logits / outputs are padded to this.


# ----------------------------- parameter init -------------------------------
def orthogonal_init(shape, std, rng):
    """Deterministic orthogonal init matching torch.nn.init.orthogonal_ semantics."""
    rows, cols = shape
    a = rng.standard_normal((rows, cols))
    if rows < cols:
        a = a.T
    q, r = np.linalg.qr(a)
    q = q * np.sign(np.diag(r))  # make decomposition unique
    if rows < cols:
        q = q.T
    return (std * q[:rows, :cols]).astype(np.float32)


def make_params(state_dim, hidden_dim, nvec, seed=0, lanes=LANES):
    """PyTorch Linear weight is (out, in); we store the transpose (in, out).
    The actor head is pre-padded to `lanes` output lanes (zero weights,
    -1e30 bias) so the kernel always works on a full 128-lane logits tile.
    Weights are bf16 (full-rate MXU); biases stay f32."""
    rng = np.random.default_rng(seed)
    nvec = [int(n) for n in nvec]
    total_actions = int(np.sum(nvec))
    assert total_actions <= lanes

    w1 = orthogonal_init((hidden_dim, state_dim), np.sqrt(2), rng).T   # (S, H)
    w2 = orthogonal_init((hidden_dim, hidden_dim), np.sqrt(2), rng).T  # (H, H)
    w3 = orthogonal_init((hidden_dim, hidden_dim), np.sqrt(2), rng).T  # (H, H)
    wh = orthogonal_init((total_actions, hidden_dim), 0.01, rng).T     # (H, TA)

    wh_pad = np.zeros((hidden_dim, lanes), np.float32)
    wh_pad[:, :total_actions] = wh
    bh_pad = np.full((1, lanes), -1e30, np.float32)   # pad lanes -> huge negative logits
    bh_pad[0, :total_actions] = 0.0

    b1 = np.zeros((1, hidden_dim), np.float32)
    b2 = np.zeros((1, hidden_dim), np.float32)
    b3 = np.zeros((1, hidden_dim), np.float32)

    return (jnp.asarray(w1, jnp.bfloat16), jnp.asarray(b1),
            jnp.asarray(w2, jnp.bfloat16), jnp.asarray(b2),
            jnp.asarray(w3, jnp.bfloat16), jnp.asarray(b3),
            jnp.asarray(wh_pad, jnp.bfloat16), jnp.asarray(bh_pad))


# ------------------------------- the kernel ---------------------------------
def make_actor_kernel(nvec, tb, lanes=LANES):
    nvec = [int(n) for n in nvec]
    n_dims = len(nvec)
    offsets = [0]
    for n in nvec:
        offsets.append(offsets[-1] + n)
    total_actions = offsets[-1]
    assert total_actions <= lanes and n_dims < lanes

    # Python / numpy SCALARS only -> jaxpr literals (no captured array consts).
    NEG = -1e30
    BIG = 2 ** 30
    M1 = np.uint32(0x7FEB352D)      # lowbias32 hash constants
    M2 = np.uint32(0x846CA68B)
    MASK23 = np.uint32(0x007FFFFF)
    HIGH = jax.lax.Precision.HIGHEST

    def kernel(seed_ref, state_ref, w1_ref, b1_ref, w2_ref, b2_ref, w3_ref, b3_ref,
               wh_ref, bh_ref, seg_ref, off_ref, out_ref):
        # ------------- MLP trunk: bf16 weights/activations, f32 accum -------
        x = state_ref[...]                                               # [TB, S] f32
        h = jnp.maximum(jnp.dot(x.astype(jnp.bfloat16), w1_ref[...],
                                preferred_element_type=jnp.float32) + b1_ref[...], 0.0)
        h = jnp.maximum(jnp.dot(h.astype(jnp.bfloat16), w2_ref[...],
                                preferred_element_type=jnp.float32) + b2_ref[...], 0.0)
        h = jnp.maximum(jnp.dot(h.astype(jnp.bfloat16), w3_ref[...],
                                preferred_element_type=jnp.float32) + b3_ref[...], 0.0)
        # Head is pre-padded to `lanes`; pad lanes land at ~-1e30 via the bias.
        logits = jnp.dot(h.astype(jnp.bfloat16), wh_ref[...],
                         preferred_element_type=jnp.float32) + bh_ref[...]   # [TB, 128]

        # -------- in-kernel Gumbel noise via a counter-based hash (VPU) -----
        row = lax.broadcasted_iota(jnp.int32, (tb, lanes), 0)
        col = lax.broadcasted_iota(jnp.int32, (tb, lanes), 1)
        gid = pl.program_id(0)
        ctr = (gid * tb + row) * lanes + col                  # unique per element
        s = seed_ref[0] * (-1640531527) + 1013904223          # mix the call seed
        xh = (ctr ^ s).astype(jnp.uint32)
        xh = xh ^ (xh >> 16)                                   # lowbias32 finalizer
        xh = xh * M1
        xh = xh ^ (xh >> 15)
        xh = xh * M2
        xh = xh ^ (xh >> 16)
        mant = (xh & MASK23).astype(jnp.int32).astype(jnp.float32)   # 23 random bits
        u = mant * (2.0 ** -23) + (2.0 ** -24)                       # uniform in (0, 1)
        vals = logits - jnp.log(-jnp.log(u))                         # logits + Gumbel

        lane_row = lax.broadcasted_iota(jnp.int32, (1, lanes), 1)

        # ---- per-dim Gumbel-max argmax: only 2 XLU reductions per dim ------
        pick = jnp.zeros((tb, lanes), jnp.float32)   # one 1.0 per sampled lane
        for d in range(n_dims):                      # static unroll
            lo, hi = offsets[d], offsets[d + 1]
            in_seg = jnp.logical_and(lane_row >= lo, lane_row < hi)      # [1,128]
            vmax = jnp.max(jnp.where(in_seg, vals, NEG), axis=1, keepdims=True)
            hit = jnp.logical_and(in_seg, vals >= vmax)
            a_lane = jnp.min(jnp.where(hit, lane_row, BIG), axis=1, keepdims=True)
            pick = pick + (lane_row == a_lane).astype(jnp.float32)

        # ------ log-softmax: exp hoisted, segmented sums/gathers on MXU -----
        gmax = jnp.max(logits, axis=1, keepdims=True)        # pad lanes are -1e30
        p = jnp.exp(logits - gmax)                           # ONE full-tile exp
        S = seg_ref[...]                                     # [128,128] one-hot segments
        sume = jnp.dot(p, S, precision=HIGH,
                       preferred_element_type=jnp.float32)   # col d = sum_seg_d exp
        plogit = jnp.dot(logits * pick, S, precision=HIGH,
                         preferred_element_type=jnp.float32)  # col d = picked logit
        plane = jnp.dot(lane_row.astype(jnp.float32) * pick, S, precision=HIGH,
                        preferred_element_type=jnp.float32)   # col d = picked abs lane

        dim_mask = (lane_row < n_dims).astype(jnp.float32)            # [1,128]
        lp_cols = plogit - gmax - jnp.log(jnp.maximum(sume, 1e-37))   # valid at lanes<n_dims
        total_lp = jnp.sum(lp_cols * dim_mask, axis=1, keepdims=True)  # [TB,1]

        actions = plane - off_ref[...]                     # col d = local action index
        lp_lane = (lane_row == n_dims).astype(jnp.float32)
        out_ref[...] = actions * dim_mask + total_lp * lp_lane   # one dense store

    return kernel


# ------------------------------- the wrapper --------------------------------
def multi_discrete_actor_forward(state, params, nvec, seed, block_b=1024):
    """Returns (action [B, n_dims] int32, log_prob [B] float32)."""
    B, state_dim = state.shape
    nvec = [int(n) for n in nvec]
    n_dims = len(nvec)
    total_actions = sum(nvec)
    assert total_actions <= LANES and n_dims < LANES
    w1, b1, w2, b2, w3, b3, wh, bh = params

    # Batch tile: multiple of 8 sublanes, capped at block_b; for larger batches
    # guarantee >= 2 grid steps so the "parallel" axis shards across v7x's 2 TCs.
    tb = min(block_b, B)
    if B >= 256:
        tb = min(tb, max(128, (B // 2 + 7) // 8 * 8))
    tb = max(8, (tb + 7) // 8 * 8)
    Bp = ((B + tb - 1) // tb) * tb                 # ragged batches -> zero-pad
    if Bp != B:
        state = jnp.concatenate(
            [state, jnp.zeros((Bp - B, state_dim), state.dtype)], axis=0)
    grid = (Bp // tb,)

    # Array-valued trace-time constants MUST be kernel inputs (no captured consts).
    offsets = np.concatenate([[0], np.cumsum(nvec)]).astype(np.int32)
    seg = np.zeros((LANES, LANES), np.float32)     # column d = indicator of segment d
    for d in range(n_dims):
        seg[offsets[d]:offsets[d + 1], d] = 1.0
    off_row = np.zeros((1, LANES), np.float32)
    off_row[0, :n_dims] = offsets[:n_dims]
    seg = jnp.asarray(seg)
    off_row = jnp.asarray(off_row)

    kernel = make_actor_kernel(nvec, tb, lanes=LANES)

    def batch_map(i, seed_ref):    # tiled over batch
        return (i, 0)

    def const_map(i, seed_ref):    # weights/constants resident across the grid
        return (0, 0)

    in_specs = [
        pl.BlockSpec((tb, state_dim), batch_map),
        pl.BlockSpec(tuple(w1.shape), const_map),
        pl.BlockSpec(tuple(b1.shape), const_map),
        pl.BlockSpec(tuple(w2.shape), const_map),
        pl.BlockSpec(tuple(b2.shape), const_map),
        pl.BlockSpec(tuple(w3.shape), const_map),
        pl.BlockSpec(tuple(b3.shape), const_map),
        pl.BlockSpec(tuple(wh.shape), const_map),
        pl.BlockSpec(tuple(bh.shape), const_map),
        pl.BlockSpec((LANES, LANES), const_map),
        pl.BlockSpec((1, LANES), const_map),
    ]

    out = pl.pallas_call(
        kernel,
        out_shape=jax.ShapeDtypeStruct((Bp, LANES), jnp.float32),
        grid_spec=pltpu.PrefetchScalarGridSpec(
            num_scalar_prefetch=1,
            grid=grid,
            in_specs=in_specs,
            out_specs=pl.BlockSpec((tb, LANES), batch_map),
        ),
        compiler_params=pltpu.CompilerParams(
            dimension_semantics=("parallel",)),
    )(jnp.asarray([seed], dtype=jnp.int32), state,
      w1, b1, w2, b2, w3, b3, wh, bh, seg, off_row)

    # Unpack the lane-dense slab (tiny XLA glue ops); drop batch padding rows.
    action = out[:B, :n_dims].astype(jnp.int32)    # exact: small ints stored in f32
    log_prob = out[:B, n_dims]
    return action, log_prob


# ---------------------------------- main -------------------------------------
if __name__ == "__main__":
    # Small shapes consistent with the module.
    B, state_dim, hidden_dim = 8, 16, 32
    action_ranges = np.array([[0, 0, 0],
                              [2, 3, 4]])          # nvec = [3, 4, 5], sum = 12
    nvec = action_ranges[1, :] + 1

    params = make_params(state_dim, hidden_dim, nvec, seed=0)

    key = jax.random.PRNGKey(0)
    k_state, k_sample = jax.random.split(key)
    state = jax.random.normal(k_state, (B, state_dim), dtype=jnp.float32)
    sample_seed = int(jax.random.randint(k_sample, (), 0, 2 ** 31 - 1))

    action, log_prob = multi_discrete_actor_forward(state, params, nvec, sample_seed)
    jax.block_until_ready((action, log_prob))

    # sanity: shapes, actions in range, log-probs valid
    assert action.shape == (B, len(nvec))
    assert log_prob.shape == (B,)
    a = np.asarray(action)
    lp = np.asarray(log_prob)
    assert np.all(a >= 0)
    assert np.all(a < np.asarray(nvec)[None, :])
    assert np.all(np.isfinite(lp))
    assert np.all(lp <= 0.0)

    print("KERNEL_OK")
</pallas_src>

<mosaic_0001>
module attributes {stable_mosaic.version = 11 : i64} {
  func.func @kernel(%arg0: i32, %arg1: memref<1xi32, #tpu.memory_space<smem>>, %arg2: memref<8x16xf32, #tpu.memory_space<vmem>>, %arg3: memref<16x32xbf16, #tpu.memory_space<vmem>>, %arg4: memref<1x32xf32, #tpu.memory_space<vmem>>, %arg5: memref<32x32xbf16, #tpu.memory_space<vmem>>, %arg6: memref<1x32xf32, #tpu.memory_space<vmem>>, %arg7: memref<32x32xbf16, #tpu.memory_space<vmem>>, %arg8: memref<1x32xf32, #tpu.memory_space<vmem>>, %arg9: memref<32x128xbf16, #tpu.memory_space<vmem>>, %arg10: memref<1x128xf32, #tpu.memory_space<vmem>>, %arg11: memref<128x128xf32, #tpu.memory_space<vmem>>, %arg12: memref<1x128xf32, #tpu.memory_space<vmem>>, %arg13: memref<8x128xf32, #tpu.memory_space<vmem>>) attributes {dimension_semantics = [#tpu.dimension_semantics<parallel>], iteration_bounds = array<i64: 1>, scalar_prefetch = 1 : i64, scratch_operands = 0 : i64, tpu.core_type = #tpu.core_type<tc>, window_params = [{transform_indices = @transform_0, window_bounds = array<i64: 8, 16>}, {pipeline_mode = #tpu.pipeline_mode<synchronous>, transform_indices = @transform_1, window_bounds = array<i64: 16, 32>}, {pipeline_mode = #tpu.pipeline_mode<synchronous>, transform_indices = @transform_2, window_bounds = array<i64: 1, 32>}, {pipeline_mode = #tpu.pipeline_mode<synchronous>, transform_indices = @transform_3, window_bounds = array<i64: 32, 32>}, {pipeline_mode = #tpu.pipeline_mode<synchronous>, transform_indices = @transform_4, window_bounds = array<i64: 1, 32>}, {pipeline_mode = #tpu.pipeline_mode<synchronous>, transform_indices = @transform_5, window_bounds = array<i64: 32, 32>}, {pipeline_mode = #tpu.pipeline_mode<synchronous>, transform_indices = @transform_6, window_bounds = array<i64: 1, 32>}, {pipeline_mode = #tpu.pipeline_mode<synchronous>, transform_indices = @transform_7, window_bounds = array<i64: 32, 128>}, {pipeline_mode = #tpu.pipeline_mode<synchronous>, transform_indices = @transform_8, window_bounds = array<i64: 1, 128>}, {pipeline_mode = #tpu.pipeline_mode<synchronous>, transform_indices = @transform_9, window_bounds = array<i64: 128, 128>}, {pipeline_mode = #tpu.pipeline_mode<synchronous>, transform_indices = @transform_10, window_bounds = array<i64: 1, 128>}, {transform_indices = @transform_11, window_bounds = array<i64: 8, 128>}]} {
    %c0 = arith.constant 0 : index
    %c0_0 = arith.constant 0 : index
    %0 = vector.load %arg2[%c0, %c0_0] : memref<8x16xf32, #tpu.memory_space<vmem>>, vector<8x16xf32>
    %1 = arith.truncf %0 : vector<8x16xf32> to vector<8x16xbf16>
    %c0_1 = arith.constant 0 : index
    %c0_2 = arith.constant 0 : index
    %2 = vector.load %arg3[%c0_1, %c0_2] : memref<16x32xbf16, #tpu.memory_space<vmem>>, vector<16x32xbf16>
    %cst = arith.constant dense<0.000000e+00> : vector<8x32xf32>
    %3 = tpu.matmul %1, %2, %cst {dimension_numbers = #tpu.dot_dimension_numbers<[1], [0], [0], [1], [0, 0, 1, 1], [], []>} : vector<8x16xbf16>, vector<16x32xbf16>, vector<8x32xf32> -> vector<8x32xf32>
    %c0_3 = arith.constant 0 : index
    %c0_4 = arith.constant 0 : index
    %4 = vector.load %arg4[%c0_3, %c0_4] : memref<1x32xf32, #tpu.memory_space<vmem>>, vector<1x32xf32>
    %5 = vector.broadcast %4 : vector<1x32xf32> to vector<8x32xf32>
    %6 = arith.addf %3, %5 : vector<8x32xf32>
    %cst_5 = arith.constant 0.000000e+00 : f32
    %7 = vector.broadcast %cst_5 : f32 to vector<8x32xf32>
    %8 = arith.maximumf %6, %7 : vector<8x32xf32>
    %9 = arith.truncf %8 : vector<8x32xf32> to vector<8x32xbf16>
    %c0_6 = arith.constant 0 : index
    %c0_7 = arith.constant 0 : index
    %10 = vector.load %arg5[%c0_6, %c0_7] : memref<32x32xbf16, #tpu.memory_space<vmem>>, vector<32x32xbf16>
    %cst_8 = arith.constant dense<0.000000e+00> : vector<8x32xf32>
    %11 = tpu.matmul %9, %10, %cst_8 {dimension_numbers = #tpu.dot_dimension_numbers<[1], [0], [0], [1], [0, 0, 1, 1], [], []>} : vector<8x32xbf16>, vector<32x32xbf16>, vector<8x32xf32> -> vector<8x32xf32>
    %c0_9 = arith.constant 0 : index
    %c0_10 = arith.constant 0 : index
    %12 = vector.load %arg6[%c0_9, %c0_10] : memref<1x32xf32, #tpu.memory_space<vmem>>, vector<1x32xf32>
    %13 = vector.broadcast %12 : vector<1x32xf32> to vector<8x32xf32>
    %14 = arith.addf %11, %13 : vector<8x32xf32>
    %cst_11 = arith.constant 0.000000e+00 : f32
    %15 = vector.broadcast %cst_11 : f32 to vector<8x32xf32>
    %16 = arith.maximumf %14, %15 : vector<8x32xf32>
    %17 = arith.truncf %16 : vector<8x32xf32> to vector<8x32xbf16>
    %c0_12 = arith.constant 0 : index
    %c0_13 = arith.constant 0 : index
    %18 = vector.load %arg7[%c0_12, %c0_13] : memref<32x32xbf16, #tpu.memory_space<vmem>>, vector<32x32xbf16>
    %cst_14 = arith.constant dense<0.000000e+00> : vector<8x32xf32>
    %19 = tpu.matmul %17, %18, %cst_14 {dimension_numbers = #tpu.dot_dimension_numbers<[1], [0], [0], [1], [0, 0, 1, 1], [], []>} : vector<8x32xbf16>, vector<32x32xbf16>, vector<8x32xf32> -> vector<8x32xf32>
    %c0_15 = arith.constant 0 : index
    %c0_16 = arith.constant 0 : index
    %20 = vector.load %arg8[%c0_15, %c0_16] : memref<1x32xf32, #tpu.memory_space<vmem>>, vector<1x32xf32>
    %21 = vector.broadcast %20 : vector<1x32xf32> to vector<8x32xf32>
    %22 = arith.addf %19, %21 : vector<8x32xf32>
    %cst_17 = arith.constant 0.000000e+00 : f32
    %23 = vector.broadcast %cst_17 : f32 to vector<8x32xf32>
    %24 = arith.maximumf %22, %23 : vector<8x32xf32>
    %25 = arith.truncf %24 : vector<8x32xf32> to vector<8x32xbf16>
    %c0_18 = arith.constant 0 : index
    %c0_19 = arith.constant 0 : index
    %26 = vector.load %arg9[%c0_18, %c0_19] : memref<32x128xbf16, #tpu.memory_space<vmem>>, vector<32x128xbf16>
    %cst_20 = arith.constant dense<0.000000e+00> : vector<8x128xf32>
    %27 = tpu.matmul %25, %26, %cst_20 {dimension_numbers = #tpu.dot_dimension_numbers<[1], [0], [0], [1], [0, 0, 1, 1], [], []>} : vector<8x32xbf16>, vector<32x128xbf16>, vector<8x128xf32> -> vector<8x128xf32>
    %c0_21 = arith.constant 0 : index
    %c0_22 = arith.constant 0 : index
    %28 = vector.load %arg10[%c0_21, %c0_22] : memref<1x128xf32, #tpu.memory_space<vmem>>, vector<1x128xf32>
    %29 = vector.broadcast %28 : vector<1x128xf32> to vector<8x128xf32>
    %30 = arith.addf %27, %29 : vector<8x128xf32>
    %31 = tpu.iota {dimensions = array<i32: 0>} : vector<8x128xi32>
    %32 = tpu.iota {dimensions = array<i32: 1>} : vector<8x128xi32>
    %c8_i32 = arith.constant 8 : i32
    %33 = arith.muli %arg0, %c8_i32 : i32
    %34 = vector.broadcast %33 : i32 to vector<8x128xi32>
    %35 = arith.addi %34, %31 : vector<8x128xi32>
    %c128_i32 = arith.constant 128 : i32
    %36 = vector.broadcast %c128_i32 : i32 to vector<8x128xi32>
    %37 = arith.muli %35, %36 : vector<8x128xi32>
    %38 = arith.addi %37, %32 : vector<8x128xi32>
    %c0_23 = arith.constant 0 : index
    %39 = memref.load %arg1[%c0_23] : memref<1xi32, #tpu.memory_space<smem>>
    %c-1640531527_i32 = arith.constant -1640531527 : i32
    %40 = arith.muli %39, %c-1640531527_i32 : i32
    %c1013904223_i32 = arith.constant 1013904223 : i32
    %41 = arith.addi %40, %c1013904223_i32 : i32
    %42 = vector.broadcast %41 : i32 to vector<8x128xi32>
    %43 = arith.xori %38, %42 : vector<8x128xi32>
    %c16_i32 = arith.constant 16 : i32
    %44 = vector.broadcast %c16_i32 : i32 to vector<8x128xi32>
    %45 = arith.shrui %43, %44 : vector<8x128xi32>
    %46 = arith.xori %43, %45 : vector<8x128xi32>
    %c2146121005_i32 = arith.constant 2146121005 : i32
    %47 = vector.broadcast %c2146121005_i32 : i32 to vector<8x128xi32>
    %48 = arith.muli %46, %47 : vector<8x128xi32>
    %c15_i32 = arith.constant 15 : i32
    %49 = vector.broadcast %c15_i32 : i32 to vector<8x128xi32>
    %50 = arith.shrui %48, %49 : vector<8x128xi32>
    %51 = arith.xori %48, %50 : vector<8x128xi32>
    %c-2073254261_i32 = arith.constant -2073254261 : i32
    %52 = vector.broadcast %c-2073254261_i32 : i32 to vector<8x128xi32>
    %53 = arith.muli %51, %52 : vector<8x128xi32>
    %c16_i32_24 = arith.constant 16 : i32
    %54 = vector.broadcast %c16_i32_24 : i32 to vector<8x128xi32>
    %55 = arith.shrui %53, %54 : vector<8x128xi32>
    %56 = arith.xori %53, %55 : vector<8x128xi32>
    %c8388607_i32 = arith.constant 8388607 : i32
    %57 = vector.broadcast %c8388607_i32 : i32 to vector<8x128xi32>
    %58 = arith.andi %56, %57 : vector<8x128xi32>
    %59 = arith.sitofp %58 : vector<8x128xi32> to vector<8x128xf32>
    %cst_25 = arith.constant 1.1920929E-7 : f32
    %60 = vector.broadcast %cst_25 : f32 to vector<8x128xf32>
    %61 = arith.mulf %59, %60 : vector<8x128xf32>
    %cst_26 = arith.constant 5.96046448E-8 : f32
    %62 = vector.broadcast %cst_26 : f32 to vector<8x128xf32>
    %63 = arith.addf %61, %62 : vector<8x128xf32>
    %64 = math.log %63 : vector<8x128xf32>
    %cst_27 = arith.constant 0.000000e+00 : f32
    %65 = vector.broadcast %cst_27 : f32 to vector<8x128xf32>
    %66 = arith.subf %65, %64 : vector<8x128xf32>
    %67 = math.log %66 : vector<8x128xf32>
    %68 = arith.subf %30, %67 : vector<8x128xf32>
    %69 = tpu.iota {dimensions = array<i32: 1>} : vector<1x128xi32>
    %cst_28 = arith.constant 0.000000e+00 : f32
    %70 = vector.broadcast %cst_28 : f32 to vector<8x128xf32>
    %c0_i32 = arith.constant 0 : i32
    %71 = vector.broadcast %c0_i32 : i32 to vector<1x128xi32>
    %72 = arith.cmpi sge, %69, %71 : vector<1x128xi32>
    %c3_i32 = arith.constant 3 : i32
    %73 = vector.broadcast %c3_i32 : i32 to vector<1x128xi32>
    %74 = arith.cmpi slt, %69, %73 : vector<1x128xi32>
    %75 = arith.andi %72, %74 : vector<1x128xi1>
    %cst_29 = arith.constant -1.000000e+30 : f32
    %76 = vector.shape_cast %75 : vector<1x128xi1> to vector<1x128xi1>
    %77 = vector.broadcast %76 : vector<1x128xi1> to vector<8x128xi1>
    %78 = vector.broadcast %cst_29 : f32 to vector<8x128xf32>
    %79 = arith.select %77, %68, %78 : vector<8x128xi1>, vector<8x128xf32>
    %cst_30 = arith.constant dense<0xFF800000> : vector<8xf32>
    %80 = vector.multi_reduction <maximumf>, %79, %cst_30 [1] : vector<8x128xf32> to vector<8xf32>
    %81 = vector.shape_cast %80 : vector<8xf32> to vector<8x1xf32>
    %82 = vector.broadcast %81 : vector<8x1xf32> to vector<8x128xf32>
    %83 = arith.cmpf oge, %68, %82 : vector<8x128xf32>
    %84 = vector.broadcast %75 : vector<1x128xi1> to vector<8x128xi1>
    %85 = arith.andi %84, %83 : vector<8x128xi1>
    %c1073741824_i32 = arith.constant 1073741824 : i32
    %86 = vector.shape_cast %69 : vector<1x128xi32> to vector<1x128xi32>
    %87 = vector.broadcast %86 : vector<1x128xi32> to vector<8x128xi32>
    %88 = vector.broadcast %c1073741824_i32 : i32 to vector<8x128xi32>
    %89 = arith.select %85, %87, %88 : vector<8x128xi1>, vector<8x128xi32>
    %cst_31 = arith.constant dense<2147483647> : vector<8xi32>
    %90 = vector.multi_reduction <minsi>, %89, %cst_31 [1] : vector<8x128xi32> to vector<8xi32>
    %91 = vector.shape_cast %90 : vector<8xi32> to vector<8x1xi32>
    %92 = vector.broadcast %69 : vector<1x128xi32> to vector<8x128xi32>
    %93 = vector.broadcast %91 : vector<8x1xi32> to vector<8x128xi32>
    %94 = arith.cmpi eq, %92, %93 : vector<8x128xi32>
    %95 = arith.extui %94 : vector<8x128xi1> to vector<8x128xi32>
    %96 = arith.sitofp %95 : vector<8x128xi32> to vector<8x128xf32>
    %97 = arith.addf %70, %96 : vector<8x128xf32>
    %c3_i32_32 = arith.constant 3 : i32
    %98 = vector.broadcast %c3_i32_32 : i32 to vector<1x128xi32>
    %99 = arith.cmpi sge, %69, %98 : vector<1x128xi32>
    %c7_i32 = arith.constant 7 : i32
    %100 = vector.broadcast %c7_i32 : i32 to vector<1x128xi32>
    %101 = arith.cmpi slt, %69, %100 : vector<1x128xi32>
    %102 = arith.andi %99, %101 : vector<1x128xi1>
    %cst_33 = arith.constant -1.000000e+30 : f32
    %103 = vector.shape_cast %102 : vector<1x128xi1> to vector<1x128xi1>
    %104 = vector.broadcast %103 : vector<1x128xi1> to vector<8x128xi1>
    %105 = vector.broadcast %cst_33 : f32 to vector<8x128xf32>
    %106 = arith.select %104, %68, %105 : vector<8x128xi1>, vector<8x128xf32>
    %cst_34 = arith.constant dense<0xFF800000> : vector<8xf32>
    %107 = vector.multi_reduction <maximumf>, %106, %cst_34 [1] : vector<8x128xf32> to vector<8xf32>
    %108 = vector.shape_cast %107 : vector<8xf32> to vector<8x1xf32>
    %109 = vector.broadcast %108 : vector<8x1xf32> to vector<8x128xf32>
    %110 = arith.cmpf oge, %68, %109 : vector<8x128xf32>
    %111 = vector.broadcast %102 : vector<1x128xi1> to vector<8x128xi1>
    %112 = arith.andi %111, %110 : vector<8x128xi1>
    %c1073741824_i32_35 = arith.constant 1073741824 : i32
    %113 = vector.shape_cast %69 : vector<1x128xi32> to vector<1x128xi32>
    %114 = vector.broadcast %113 : vector<1x128xi32> to vector<8x128xi32>
    %115 = vector.broadcast %c1073741824_i32_35 : i32 to vector<8x128xi32>
    %116 = arith.select %112, %114, %115 : vector<8x128xi1>, vector<8x128xi32>
    %cst_36 = arith.constant dense<2147483647> : vector<8xi32>
    %117 = vector.multi_reduction <minsi>, %116, %cst_36 [1] : vector<8x128xi32> to vector<8xi32>
    %118 = vector.shape_cast %117 : vector<8xi32> to vector<8x1xi32>
    %119 = vector.broadcast %69 : vector<1x128xi32> to vector<8x128xi32>
    %120 = vector.broadcast %118 : vector<8x1xi32> to vector<8x128xi32>
    %121 = arith.cmpi eq, %119, %120 : vector<8x128xi32>
    %122 = arith.extui %121 : vector<8x128xi1> to vector<8x128xi32>
    %123 = arith.sitofp %122 : vector<8x128xi32> to vector<8x128xf32>
    %124 = arith.addf %97, %123 : vector<8x128xf32>
    %c7_i32_37 = arith.constant 7 : i32
    %125 = vector.broadcast %c7_i32_37 : i32 to vector<1x128xi32>
    %126 = arith.cmpi sge, %69, %125 : vector<1x128xi32>
    %c12_i32 = arith.constant 12 : i32
    %127 = vector.broadcast %c12_i32 : i32 to vector<1x128xi32>
    %128 = arith.cmpi slt, %69, %127 : vector<1x128xi32>
    %129 = arith.andi %126, %128 : vector<1x128xi1>
    %cst_38 = arith.constant -1.000000e+30 : f32
    %130 = vector.shape_cast %129 : vector<1x128xi1> to vector<1x128xi1>
    %131 = vector.broadcast %130 : vector<1x128xi1> to vector<8x128xi1>
    %132 = vector.broadcast %cst_38 : f32 to vector<8x128xf32>
    %133 = arith.select %131, %68, %132 : vector<8x128xi1>, vector<8x128xf32>
    %cst_39 = arith.constant dense<0xFF800000> : vector<8xf32>
    %134 = vector.multi_reduction <maximumf>, %133, %cst_39 [1] : vector<8x128xf32> to vector<8xf32>
    %135 = vector.shape_cast %134 : vector<8xf32> to vector<8x1xf32>
    %136 = vector.broadcast %135 : vector<8x1xf32> to vector<8x128xf32>
    %137 = arith.cmpf oge, %68, %136 : vector<8x128xf32>
    %138 = vector.broadcast %129 : vector<1x128xi1> to vector<8x128xi1>
    %139 = arith.andi %138, %137 : vector<8x128xi1>
    %c1073741824_i32_40 = arith.constant 1073741824 : i32
    %140 = vector.shape_cast %69 : vector<1x128xi32> to vector<1x128xi32>
    %141 = vector.broadcast %140 : vector<1x128xi32> to vector<8x128xi32>
    %142 = vector.broadcast %c1073741824_i32_40 : i32 to vector<8x128xi32>
    %143 = arith.select %139, %141, %142 : vector<8x128xi1>, vector<8x128xi32>
    %cst_41 = arith.constant dense<2147483647> : vector<8xi32>
    %144 = vector.multi_reduction <minsi>, %143, %cst_41 [1] : vector<8x128xi32> to vector<8xi32>
    %145 = vector.shape_cast %144 : vector<8xi32> to vector<8x1xi32>
    %146 = vector.broadcast %69 : vector<1x128xi32> to vector<8x128xi32>
    %147 = vector.broadcast %145 : vector<8x1xi32> to vector<8x128xi32>
    %148 = arith.cmpi eq, %146, %147 : vector<8x128xi32>
    %149 = arith.extui %148 : vector<8x128xi1> to vector<8x128xi32>
    %150 = arith.sitofp %149 : vector<8x128xi32> to vector<8x128xf32>
    %151 = arith.addf %124, %150 : vector<8x128xf32>
    %cst_42 = arith.constant dense<0xFF800000> : vector<8xf32>
    %152 = vector.multi_reduction <maximumf>, %30, %cst_42 [1] : vector<8x128xf32> to vector<8xf32>
    %153 = vector.shape_cast %152 : vector<8xf32> to vector<8x1xf32>
    %154 = vector.broadcast %153 : vector<8x1xf32> to vector<8x128xf32>
    %155 = arith.subf %30, %154 : vector<8x128xf32>
    %156 = math.exp %155 : vector<8x128xf32>
    %c0_43 = arith.constant 0 : index
    %c0_44 = arith.constant 0 : index
    %157 = vector.load %arg11[%c0_43, %c0_44] : memref<128x128xf32, #tpu.memory_space<vmem>>, vector<128x128xf32>
    %cst_45 = arith.constant dense<0.000000e+00> : vector<8x128xf32>
    %158 = tpu.matmul %156, %157, %cst_45 {dimension_numbers = #tpu.dot_dimension_numbers<[1], [0], [0], [1], [0, 0, 1, 1], [], []>, precision = #tpu.contract_precision<fp32>} : vector<8x128xf32>, vector<128x128xf32>, vector<8x128xf32> -> vector<8x128xf32>
    %159 = arith.mulf %30, %151 : vector<8x128xf32>
    %cst_46 = arith.constant dense<0.000000e+00> : vector<8x128xf32>
    %160 = tpu.matmul %159, %157, %cst_46 {dimension_numbers = #tpu.dot_dimension_numbers<[1], [0], [0], [1], [0, 0, 1, 1], [], []>, precision = #tpu.contract_precision<fp32>} : vector<8x128xf32>, vector<128x128xf32>, vector<8x128xf32> -> vector<8x128xf32>
    %161 = arith.sitofp %69 : vector<1x128xi32> to vector<1x128xf32>
    %162 = vector.broadcast %161 : vector<1x128xf32> to vector<8x128xf32>
    %163 = arith.mulf %162, %151 : vector<8x128xf32>
    %cst_47 = arith.constant dense<0.000000e+00> : vector<8x128xf32>
    %164 = tpu.matmul %163, %157, %cst_47 {dimension_numbers = #tpu.dot_dimension_numbers<[1], [0], [0], [1], [0, 0, 1, 1], [], []>, precision = #tpu.contract_precision<fp32>} : vector<8x128xf32>, vector<128x128xf32>, vector<8x128xf32> -> vector<8x128xf32>
    %c3_i32_48 = arith.constant 3 : i32
    %165 = vector.broadcast %c3_i32_48 : i32 to vector<1x128xi32>
    %166 = arith.cmpi slt, %69, %165 : vector<1x128xi32>
    %167 = arith.extui %166 : vector<1x128xi1> to vector<1x128xi32>
    %168 = arith.sitofp %167 : vector<1x128xi32> to vector<1x128xf32>
    %169 = vector.broadcast %153 : vector<8x1xf32> to vector<8x128xf32>
    %170 = arith.subf %160, %169 : vector<8x128xf32>
    %cst_49 = arith.constant 9.99999991E-38 : f32
    %171 = vector.broadcast %cst_49 : f32 to vector<8x128xf32>
    %172 = arith.maximumf %158, %171 : vector<8x128xf32>
    %173 = math.log %172 : vector<8x128xf32>
    %174 = arith.subf %170, %173 : vector<8x128xf32>
    %175 = vector.broadcast %168 : vector<1x128xf32> to vector<8x128xf32>
    %176 = arith.mulf %174, %175 : vector<8x128xf32>
    %cst_50 = arith.constant dense<0.000000e+00> : vector<8xf32>
    %177 = vector.multi_reduction <add>, %176, %cst_50 [1] : vector<8x128xf32> to vector<8xf32>
    %178 = vector.shape_cast %177 : vector<8xf32> to vector<8x1xf32>
    %c0_51 = arith.constant 0 : index
    %c0_52 = arith.constant 0 : index
    %179 = vector.load %arg12[%c0_51, %c0_52] : memref<1x128xf32, #tpu.memory_space<vmem>>, vector<1x128xf32>
    %180 = vector.broadcast %179 : vector<1x128xf32> to vector<8x128xf32>
    %181 = arith.subf %164, %180 : vector<8x128xf32>
    %c3_i32_53 = arith.constant 3 : i32
    %182 = vector.broadcast %c3_i32_53 : i32 to vector<1x128xi32>
    %183 = arith.cmpi eq, %69, %182 : vector<1x128xi32>
    %184 = arith.extui %183 : vector<1x128xi1> to vector<1x128xi32>
    %185 = arith.sitofp %184 : vector<1x128xi32> to vector<1x128xf32>
    %186 = vector.broadcast %168 : vector<1x128xf32> to vector<8x128xf32>
    %187 = arith.mulf %181, %186 : vector<8x128xf32>
    %188 = vector.broadcast %178 : vector<8x1xf32> to vector<8x128xf32>
    %189 = vector.broadcast %185 : vector<1x128xf32> to vector<8x128xf32>
    %190 = arith.mulf %188, %189 : vector<8x128xf32>
    %191 = arith.addf %187, %190 : vector<8x128xf32>
    %c0_54 = arith.constant 0 : index
    %c0_55 = arith.constant 0 : index
    %192 = vector.load %arg13[%c0_54, %c0_55] : memref<8x128xf32, #tpu.memory_space<vmem>>, vector<8x128xf32>
    tpu.vector_store %arg13[%c0_54, %c0_55], %191 {strides = array<i32>} : memref<8x128xf32, #tpu.memory_space<vmem>>, vector<8x128xf32>,
    return
  }
  func.func @transform_0(%arg0: i32, %arg1: memref<1xi32, #tpu.memory_space<smem>>) -> (i32, i32) {
    %c0_i32 = arith.constant 0 : i32
    %c0_i32_0 = arith.constant 0 : i32
    return %arg0, %c0_i32 : i32, i32
  }
  func.func @transform_1(%arg0: i32, %arg1: memref<1xi32, #tpu.memory_space<smem>>) -> (i32, i32) {
    %c0_i32 = arith.constant 0 : i32
    %c0_i32_0 = arith.constant 0 : i32
    %c0_i32_1 = arith.constant 0 : i32
    return %c0_i32, %c0_i32_0 : i32, i32
  }
  func.func @transform_2(%arg0: i32, %arg1: memref<1xi32, #tpu.memory_space<smem>>) -> (i32, i32) {
    %c0_i32 = arith.constant 0 : i32
    %c0_i32_0 = arith.constant 0 : i32
    %c0_i32_1 = arith.constant 0 : i32
    return %c0_i32, %c0_i32_0 : i32, i32
  }
  func.func @transform_3(%arg0: i32, %arg1: memref<1xi32, #tpu.memory_space<smem>>) -> (i32, i32) {
    %c0_i32 = arith.constant 0 : i32
    %c0_i32_0 = arith.constant 0 : i32
    %c0_i32_1 = arith.constant 0 : i32
    return %c0_i32, %c0_i32_0 : i32, i32
  }
  func.func @transform_4(%arg0: i32, %arg1: memref<1xi32, #tpu.memory_space<smem>>) -> (i32, i32) {
    %c0_i32 = arith.constant 0 : i32
    %c0_i32_0 = arith.constant 0 : i32
    %c0_i32_1 = arith.constant 0 : i32
    return %c0_i32, %c0_i32_0 : i32, i32
  }
  func.func @transform_5(%arg0: i32, %arg1: memref<1xi32, #tpu.memory_space<smem>>) -> (i32, i32) {
    %c0_i32 = arith.constant 0 : i32
    %c0_i32_0 = arith.constant 0 : i32
    %c0_i32_1 = arith.constant 0 : i32
    return %c0_i32, %c0_i32_0 : i32, i32
  }
  func.func @transform_6(%arg0: i32, %arg1: memref<1xi32, #tpu.memory_space<smem>>) -> (i32, i32) {
    %c0_i32 = arith.constant 0 : i32
    %c0_i32_0 = arith.constant 0 : i32
    %c0_i32_1 = arith.constant 0 : i32
    return %c0_i32, %c0_i32_0 : i32, i32
  }
  func.func @transform_7(%arg0: i32, %arg1: memref<1xi32, #tpu.memory_space<smem>>) -> (i32, i32) {
    %c0_i32 = arith.constant 0 : i32
    %c0_i32_0 = arith.constant 0 : i32
    %c0_i32_1 = arith.constant 0 : i32
    return %c0_i32, %c0_i32_0 : i32, i32
  }
  func.func @transform_8(%arg0: i32, %arg1: memref<1xi32, #tpu.memory_space<smem>>) -> (i32, i32) {
    %c0_i32 = arith.constant 0 : i32
    %c0_i32_0 = arith.constant 0 : i32
    %c0_i32_1 = arith.constant 0 : i32
    return %c0_i32, %c0_i32_0 : i32, i32
  }
  func.func @transform_9(%arg0: i32, %arg1: memref<1xi32, #tpu.memory_space<smem>>) -> (i32, i32) {
    %c0_i32 = arith.constant 0 : i32
    %c0_i32_0 = arith.constant 0 : i32
    %c0_i32_1 = arith.constant 0 : i32
    return %c0_i32, %c0_i32_0 : i32, i32
  }
  func.func @transform_10(%arg0: i32, %arg1: memref<1xi32, #tpu.memory_space<smem>>) -> (i32, i32) {
    %c0_i32 = arith.constant 0 : i32
    %c0_i32_0 = arith.constant 0 : i32
    %c0_i32_1 = arith.constant 0 : i32
    return %c0_i32, %c0_i32_0 : i32, i32
  }
  func.func @transform_11(%arg0: i32, %arg1: memref<1xi32, #tpu.memory_space<smem>>) -> (i32, i32) {
    %c0_i32 = arith.constant 0 : i32
    %c0_i32_0 = arith.constant 0 : i32
    return %arg0, %c0_i32 : i32, i32
  }
}

</mosaic_0001>

<llo_original>
// kernel: tpu_custom_call.1
$region0: #{tpu_custom_call.1}
  #allocation0 [shape = 'u32[]', space=smem, size = 0x4, offset = 0x4, fixed_abs, tag = 'smem constant byte address 0x4 - core index']
  #allocation1 [shape = 'u32[144,128]{1,0:T(1,128)}', space=vmem, size = 0x12000, scoped, tag = 'internal scratch']
  #allocation2 [shape = 's32[1]{0}', space=sflag, size = 0x4, scoped, tag = 'scoped memory for tpu_custom_call.1']
  #allocation3 [shape = 's32[1]{0:T(128)S(6)}', space=smem, size = 0x200, scoped, tag = 'prefetched SMEM operand 0']
  %s0 = inlined_call_operand.<no memory space> [shape: s32[1], index: 0, kind: input, shape index: {}]
  %s1 = inlined_call_operand.hbm [shape: f32[8,16], index: 1, kind: input, shape index: {}]
  %s2 = inlined_call_operand.hbm [shape: bf16[16,32], index: 2, kind: input, shape index: {}]
  %s3 = inlined_call_operand.vmem [shape: f32[1,32], index: 3, kind: input, shape index: {}]
  %s4 = inlined_call_operand.hbm [shape: bf16[32,32], index: 4, kind: input, shape index: {}]
  %s5 = inlined_call_operand.vmem [shape: f32[1,32], index: 5, kind: input, shape index: {}]
  %s6 = inlined_call_operand.hbm [shape: bf16[32,32], index: 6, kind: input, shape index: {}]
  %s7 = inlined_call_operand.vmem [shape: f32[1,32], index: 7, kind: input, shape index: {}]
  %s8 = inlined_call_operand.hbm [shape: bf16[32,128], index: 8, kind: input, shape index: {}]
  %s9 = inlined_call_operand.vmem [shape: f32[1,128], index: 9, kind: input, shape index: {}]
  %s10 = inlined_call_operand.hbm [shape: f32[128,128], index: 10, kind: input, shape index: {}]
  %s11 = inlined_call_operand.vmem [shape: f32[1,128], index: 11, kind: input, shape index: {}]
  %s12 = inlined_call_operand.hbm [shape: f32[8,128], index: 12, kind: output, shape index: {}]
  %s13 = sld [smem:[#allocation0]]
  $region78: #{tpu_custom_call.1} parent=0
    _
  %s15 = ssub.s32 1, %s13
  %s16 = scalar_select 0, %s15, %s13
  %17 = sst [smem:[#allocation3]] %s0
  $region1: #{tpu_custom_call.1} parent=0
    #allocation4 [shape = 'u8[4096]{0}', space=vmem, size = 0x1000, scoped, tag = 'input window, operand 1, single buffered']
    #allocation5 [shape = 's32[1]{0}', space=sflag, size = 0x4, scoped, tag = 'scoped memory for tpu_custom_call.1']
    #allocation6 [shape = 's32[1]{0}', space=sflag, size = 0x4, scoped, tag = 'scoped memory for tpu_custom_call.1']
    #allocation7 [shape = 'u8[4096]{0}', space=vmem, size = 0x1000, scoped, tag = 'input window, operand 2, single buffered']
    #allocation8 [shape = 's32[1]{0}', space=sflag, size = 0x4, scoped, tag = 'scoped memory for tpu_custom_call.1']
    #allocation9 [shape = 'u8[8192]{0}', space=vmem, size = 0x2000, scoped, tag = 'input window, operand 4, single buffered']
    #allocation10 [shape = 'u8[8192]{0}', space=vmem, size = 0x2000, scoped, tag = 'input window, operand 6, single buffered']
    #allocation11 [shape = 's32[1]{0}', space=sflag, size = 0x4, scoped, tag = 'scoped memory for tpu_custom_call.1']
    #allocation12 [shape = 'u8[8192]{0}', space=vmem, size = 0x2000, scoped, tag = 'input window, operand 8, single buffered']
    #allocation13 [shape = 'u8[65536]{0}', space=vmem, size = 0x10000, scoped, tag = 'input window, operand 10, single buffered']
    #allocation14 [shape = 's32[1]{0}', space=sflag, size = 0x4, scoped, tag = 'scoped memory for tpu_custom_call.1']
    #allocation15 [shape = 'u8[4096]{0}', space=vmem, size = 0x1000, scoped, tag = 'output window, operand 0, single buffered']
    %18 = vsyncpa [#allocation5], 0
    %19 = vsyncpa [#allocation8], 0
    %20 = vsyncpa [#allocation11], 0
    %21 = vsyncpa [#allocation14], 0
    %22 = vsyncpa [#allocation6], 0
    // Predicated region
    $region2: #{tpu_custom_call.1} parent=1 // pred_check
      _
    $region3: #{tpu_custom_call.1} parent=1 // pred_check_branch
      %24 = sbr.rel (0) target = $region5
    $region4: #{tpu_custom_call.1} parent=1 // pred_region
      %s26 = ssub.s32 128, 128
      %27 = vsyncadd [#allocation5], %s26
      %s29 = sshll.u32 [#allocation4], 4
      %s30 = int_to_ptr.vmem [resolvable:$true] %s29
      %32 = dma.hbm_to_vmem [thread:$0]  %s1, 128, %s30, [#allocation5]
    $region5: #{tpu_custom_call.1} parent=1 // pred_fallthru
      _
    // Predicated region
    $region6: #{tpu_custom_call.1} parent=1 // pred_check
      _
    $region7: #{tpu_custom_call.1} parent=1 // pred_check_branch
      %34 = sbr.rel (0) target = $region9
    $region8: #{tpu_custom_call.1} parent=1 // pred_region
      %s36 = ssub.s32 128, 128
      %37 = vsyncadd [#allocation8], %s36
      %s38 = sshll.u32 [#allocation7], 4
      %s39 = int_to_ptr.vmem [resolvable:$true] %s38
      %44 = dma.hbm_to_vmem [thread:$0]  %s2, 128, %s39, [#allocation8], 64, 64, 4
    $region9: #{tpu_custom_call.1} parent=1 // pred_fallthru
      _
    // Predicated region
    $region10: #{tpu_custom_call.1} parent=1 // pred_check
      _
    $region11: #{tpu_custom_call.1} parent=1 // pred_check_branch
      %46 = sbr.rel (0) target = $region13
    $region12: #{tpu_custom_call.1} parent=1 // pred_region
      _
    $region13: #{tpu_custom_call.1} parent=1 // pred_fallthru
      _
    // Predicated region
    $region14: #{tpu_custom_call.1} parent=1 // pred_check
      _
    $region15: #{tpu_custom_call.1} parent=1 // pred_check_branch
      %48 = sbr.rel (0) target = $region17
    $region16: #{tpu_custom_call.1} parent=1 // pred_region
      %s50 = ssub.s32 256, 256
      %51 = vsyncadd [#allocation8], %s50
      %s52 = sshll.u32 [#allocation9], 4
      %s53 = int_to_ptr.vmem [resolvable:$true] %s52
      %58 = dma.hbm_to_vmem [thread:$0]  %s4, 256, %s53, [#allocation8], 64, 64, 4
    $region17: #{tpu_custom_call.1} parent=1 // pred_fallthru
      _
    // Predicated region
    $region18: #{tpu_custom_call.1} parent=1 // pred_check
      _
    $region19: #{tpu_custom_call.1} parent=1 // pred_check_branch
      %60 = sbr.rel (0) target = $region21
    $region20: #{tpu_custom_call.1} parent=1 // pred_region
      _
    $region21: #{tpu_custom_call.1} parent=1 // pred_fallthru
      _
    // Predicated region
    $region22: #{tpu_custom_call.1} parent=1 // pred_check
      _
    $region23: #{tpu_custom_call.1} parent=1 // pred_check_branch
      %62 = sbr.rel (0) target = $region25
    $region24: #{tpu_custom_call.1} parent=1 // pred_region
      %s64 = ssub.s32 256, 256
      %65 = vsyncadd [#allocation11], %s64
      %s66 = sshll.u32 [#allocation10], 4
      %s67 = int_to_ptr.vmem [resolvable:$true] %s66
      %72 = dma.hbm_to_vmem [thread:$0]  %s6, 256, %s67, [#allocation11], 64, 64, 4
    $region25: #{tpu_custom_call.1} parent=1 // pred_fallthru
      _
    // Predicated region
    $region26: #{tpu_custom_call.1} parent=1 // pred_check
      _
    $region27: #{tpu_custom_call.1} parent=1 // pred_check_branch
      %74 = sbr.rel (0) target = $region29
    $region28: #{tpu_custom_call.1} parent=1 // pred_region
      _
    $region29: #{tpu_custom_call.1} parent=1 // pred_fallthru
      _
    // Predicated region
    $region30: #{tpu_custom_call.1} parent=1 // pred_check
      _
    $region31: #{tpu_custom_call.1} parent=1 // pred_check_branch
      %76 = sbr.rel (0) target = $region33
    $region32: #{tpu_custom_call.1} parent=1 // pred_region
      %s78 = ssub.s32 256, 256
      %79 = vsyncadd [#allocation11], %s78
      %s80 = sshll.u32 [#allocation12], 4
      %s81 = int_to_ptr.vmem [resolvable:$true] %s80
      %86 = dma.hbm_to_vmem [thread:$0]  %s8, 256, %s81, [#allocation11], 64, 64, 4
    $region33: #{tpu_custom_call.1} parent=1 // pred_fallthru
      _
    // Predicated region
    $region34: #{tpu_custom_call.1} parent=1 // pred_check
      _
    $region35: #{tpu_custom_call.1} parent=1 // pred_check_branch
      %88 = sbr.rel (0) target = $region37
    $region36: #{tpu_custom_call.1} parent=1 // pred_region
      _
    $region37: #{tpu_custom_call.1} parent=1 // pred_fallthru
      _
    // Predicated region
    $region38: #{tpu_custom_call.1} parent=1 // pred_check
      _
    $region39: #{tpu_custom_call.1} parent=1 // pred_check_branch
      %90 = sbr.rel (0) target = $region41
    $region40: #{tpu_custom_call.1} parent=1 // pred_region
      %s92 = ssub.s32 2048, 2048
      %93 = vsyncadd [#allocation14], %s92
      %s94 = sshll.u32 [#allocation13], 4
      %s95 = int_to_ptr.vmem [resolvable:$true] %s94
      %100 = dma.hbm_to_vmem [thread:$0]  %s10, 2048, %s95, [#allocation14], 128, 128, 8
    $region41: #{tpu_custom_call.1} parent=1 // pred_fallthru
      _
    // Predicated region
    $region42: #{tpu_custom_call.1} parent=1 // pred_check
      _
    $region43: #{tpu_custom_call.1} parent=1 // pred_check_branch
      %102 = sbr.rel (0) target = $region45
    $region44: #{tpu_custom_call.1} parent=1 // pred_region
      _
    $region45: #{tpu_custom_call.1} parent=1 // pred_fallthru
      _
    // Predicated region
    $region46: #{tpu_custom_call.1} parent=1 // pred_check
      _
    $region47: #{tpu_custom_call.1} parent=1 // pred_check_branch
      %104 = sbr.rel (0) target = $region49
    $region48: #{tpu_custom_call.1} parent=1 // pred_region
      %105 = dma.done [#allocation5], 128
    $region49: #{tpu_custom_call.1} parent=1 // pred_fallthru
      _
    // Predicated region
    $region50: #{tpu_custom_call.1} parent=1 // pred_check
      _
    $region51: #{tpu_custom_call.1} parent=1 // pred_check_branch
      %107 = sbr.rel (0) target = $region53
    $region52: #{tpu_custom_call.1} parent=1 // pred_region
      %108 = dma.done [#allocation8], 128
    $region53: #{tpu_custom_call.1} parent=1 // pred_fallthru
      _
    // Predicated region
    $region54: #{tpu_custom_call.1} parent=1 // pred_check
      _
    $region55: #{tpu_custom_call.1} parent=1 // pred_check_branch
      %110 = sbr.rel (0) target = $region57
    $region56: #{tpu_custom_call.1} parent=1 // pred_region
      %111 = dma.done [#allocation8], 256
    $region57: #{tpu_custom_call.1} parent=1 // pred_fallthru
      _
    // Predicated region
    $region58: #{tpu_custom_call.1} parent=1 // pred_check
      _
    $region59: #{tpu_custom_call.1} parent=1 // pred_check_branch
      %113 = sbr.rel (0) target = $region61
    $region60: #{tpu_custom_call.1} parent=1 // pred_region
      %114 = dma.done [#allocation11], 256
    $region61: #{tpu_custom_call.1} parent=1 // pred_fallthru
      _
    // Predicated region
    $region62: #{tpu_custom_call.1} parent=1 // pred_check
      _
    $region63: #{tpu_custom_call.1} parent=1 // pred_check_branch
      %116 = sbr.rel (0) target = $region65
    $region64: #{tpu_custom_call.1} parent=1 // pred_region
      %117 = dma.done [#allocation11], 256
    $region65: #{tpu_custom_call.1} parent=1 // pred_fallthru
      _
    // Predicated region
    $region66: #{tpu_custom_call.1} parent=1 // pred_check
      _
    $region67: #{tpu_custom_call.1} parent=1 // pred_check_branch
      %119 = sbr.rel (0) target = $region69
    $region68: #{tpu_custom_call.1} parent=1 // pred_region
      %120 = dma.done [#allocation14], 2048
    $region69: #{tpu_custom_call.1} parent=1 // pred_fallthru
      _
    %v122 = vld [vmem:[#allocation4] sm:$0xff]
    %v123 = vpack.c.bf16 %v122, %v122
    %v124 = vld [vmem:[#allocation7] sm:$0xf]
    %v125 = vld [vmem:[#allocation7 + $0x4] sm:$0xf]
    %v126 = vld [vmem:[%s3] sm:$0x1]
    %v128 = vlaneseq
    %v129 = vshrl.u32 %v128, 7
    %v130 = vsub.s32 0, %v129
    %v131 = vrot.slane %v126, %v130
    %v135 = vunpack.c.l.b16 %v124
    %v136 = vunpack.c.l.b16 %v125
    %v137 = vpack.c.b16 %v136, %v135
    %vm139 = vcmask 130048
    %v141 = vsel %vm139, %v123, 0
    %143 = vmatprep.subr.bf16.mxu0 0
    %144 = vmatpush1.bf16.msra.mxu0 0
    %145 = vmatprep.subr.bf16.mxu0 0
    %146 = vmatpush1.bf16.msra.mxu0 0
    %147 = vmatprep.subr.bf16.mxu0 0
    %148 = vmatpush1.bf16.msra.mxu0 0
    %149 = vmatprep.subr.bf16.mxu0 0
    %150 = vmatpush1.bf16.msra.mxu0 0
    %151 = vmatprep.subr.bf16.mxu0 0
    %152 = vmatpush1.bf16.msra.mxu0 0
    %153 = vmatprep.subr.bf16.mxu0 0
    %154 = vmatpush1.bf16.msra.mxu0 0
    %155 = vmatprep.subr.bf16.mxu0 0
    %156 = vmatpush1.bf16.msra.mxu0 0
    %157 = vmatprep.subr.bf16.mxu0 0
    %158 = vmatpush1.bf16.msra.mxu0 %v137
    %159 = vmatprep.subr.bf16.mxu0 0
    %160 = vmatpush2.bf16.msra.mxu0 0
    %161 = vmatprep.subr.bf16.mxu0 0
    %162 = vmatpush2.bf16.msra.mxu0 0
    %163 = vmatprep.subr.bf16.mxu0 0
    %164 = vmatpush2.bf16.msra.mxu0 0
    %165 = vmatprep.subr.bf16.mxu0 0
    %166 = vmatpush2.bf16.msra.mxu0 0
    %167 = vmatprep.subr.bf16.mxu0 0
    %168 = vmatpush2.bf16.msra.mxu0 0
    %169 = vmatprep.subr.bf16.mxu0 0
    %170 = vmatpush2.bf16.msra.mxu0 0
    %171 = vmatprep.subr.bf16.mxu0 0
    %172 = vmatpush2.bf16.msra.mxu0 0
    %173 = vmatprep.subr.bf16.mxu0 0
    %174 = vmatpush2.bf16.msra.mxu0 0
    %175 = vmatprep.mubr.bf16.mxu0 0
    %176 = vmatmul.mubr.bf16.gmra.mxu0 %v141
    %v177 = vpop.f32.mrf.mxu0
    %v178 = vadd.f32 %v131, %v177
    %v179 = vpop.f32.mrf.mxu0
    %v180 = vpop.f32.mrf.mxu0
    %v181 = vpop.f32.mrf.mxu0
    %182 = vdwg.mxu0
    %v183 = vmax.f32 %v178, 0.0
    %v184 = vpack.c.bf16 %v183, %v183
    %v185 = vld [vmem:[#allocation9] sm:$0xf]
    %v186 = vld [vmem:[#allocation9 + $0x4] sm:$0xf]
    %v187 = vld [vmem:[#allocation9 + $0x8] sm:$0xf]
    %v188 = vld [vmem:[#allocation9 + $0xc] sm:$0xf]
    %v189 = vld [vmem:[%s5] sm:$0x1]
    %v191 = vlaneseq
    %v192 = vshrl.u32 %v191, 7
    %v193 = vsub.s32 0, %v192
    %v194 = vrot.slane %v189, %v193
    %v200 = vunpack.c.l.b16 %v185
    %v201 = vunpack.c.l.b16 %v186
    %v202 = vunpack.c.l.b16 %v187
    %v203 = vunpack.c.l.b16 %v188
    %v204 = vpack.c.b16 %v201, %v200
    %v205 = vpack.c.b16 %v203, %v202
    %vm208 = vcmask 261120
    %v210 = vsel %vm208, %v184, 0
    %212 = vmatprep.subr.bf16.mxu0 0
    %213 = vmatpush1.bf16.msra.mxu0 0
    %214 = vmatprep.subr.bf16.mxu0 0
    %215 = vmatpush1.bf16.msra.mxu0 0
    %216 = vmatprep.subr.bf16.mxu0 0
    %217 = vmatpush1.bf16.msra.mxu0 0
    %218 = vmatprep.subr.bf16.mxu0 0
    %219 = vmatpush1.bf16.msra.mxu0 0
    %220 = vmatprep.subr.bf16.mxu0 0
    %221 = vmatpush1.bf16.msra.mxu0 0
    %222 = vmatprep.subr.bf16.mxu0 0
    %223 = vmatpush1.bf16.msra.mxu0 0
    %224 = vmatprep.subr.bf16.mxu0 0
    %225 = vmatpush1.bf16.msra.mxu0 %v205
    %226 = vmatprep.subr.bf16.mxu0 0
    %227 = vmatpush1.bf16.msra.mxu0 %v204
    %228 = vmatprep.subr.bf16.mxu0 0
    %229 = vmatpush2.bf16.msra.mxu0 0
    %230 = vmatprep.subr.bf16.mxu0 0
    %231 = vmatpush2.bf16.msra.mxu0 0
    %232 = vmatprep.subr.bf16.mxu0 0
    %233 = vmatpush2.bf16.msra.mxu0 0
    %234 = vmatprep.subr.bf16.mxu0 0
    %235 = vmatpush2.bf16.msra.mxu0 0
    %236 = vmatprep.subr.bf16.mxu0 0
    %237 = vmatpush2.bf16.msra.mxu0 0
    %238 = vmatprep.subr.bf16.mxu0 0
    %239 = vmatpush2.bf16.msra.mxu0 0
    %240 = vmatprep.subr.bf16.mxu0 0
    %241 = vmatpush2.bf16.msra.mxu0 0
    %242 = vmatprep.subr.bf16.mxu0 0
    %243 = vmatpush2.bf16.msra.mxu0 0
    %244 = vmatprep.mubr.bf16.mxu0 0
    %245 = vmatmul.mubr.bf16.gmra.mxu0 %v210
    %v246 = vpop.f32.mrf.mxu0
    %v247 = vadd.f32 %v194, %v246
    %v248 = vpop.f32.mrf.mxu0
    %v249 = vpop.f32.mrf.mxu0
    %v250 = vpop.f32.mrf.mxu0
    %251 = vdwg.mxu0
    %v252 = vmax.f32 %v247, 0.0
    %v253 = vpack.c.bf16 %v252, %v252
    %v254 = vld [vmem:[#allocation10] sm:$0xf]
    %v255 = vld [vmem:[#allocation10 + $0x4] sm:$0xf]
    %v256 = vld [vmem:[#allocation10 + $0x8] sm:$0xf]
    %v257 = vld [vmem:[#allocation10 + $0xc] sm:$0xf]
    %v258 = vld [vmem:[%s7] sm:$0x1]
    %v260 = vlaneseq
    %v261 = vshrl.u32 %v260, 7
    %v262 = vsub.s32 0, %v261
    %v263 = vrot.slane %v258, %v262
    %v269 = vunpack.c.l.b16 %v254
    %v270 = vunpack.c.l.b16 %v255
    %v271 = vunpack.c.l.b16 %v256
    %v272 = vunpack.c.l.b16 %v257
    %v273 = vpack.c.b16 %v270, %v269
    %v274 = vpack.c.b16 %v272, %v271
    %v278 = vsel %vm208, %v253, 0
    %280 = vmatprep.subr.bf16.mxu0 0
    %281 = vmatpush1.bf16.msra.mxu0 0
    %282 = vmatprep.subr.bf16.mxu0 0
    %283 = vmatpush1.bf16.msra.mxu0 0
    %284 = vmatprep.subr.bf16.mxu0 0
    %285 = vmatpush1.bf16.msra.mxu0 0
    %286 = vmatprep.subr.bf16.mxu0 0
    %287 = vmatpush1.bf16.msra.mxu0 0
    %288 = vmatprep.subr.bf16.mxu0 0
    %289 = vmatpush1.bf16.msra.mxu0 0
    %290 = vmatprep.subr.bf16.mxu0 0
    %291 = vmatpush1.bf16.msra.mxu0 0
    %292 = vmatprep.subr.bf16.mxu0 0
    %293 = vmatpush1.bf16.msra.mxu0 %v274
    %294 = vmatprep.subr.bf16.mxu0 0
    %295 = vmatpush1.bf16.msra.mxu0 %v273
    %296 = vmatprep.subr.bf16.mxu0 0
    %297 = vmatpush2.bf16.msra.mxu0 0
    %298 = vmatprep.subr.bf16.mxu0 0
    %299 = vmatpush2.bf16.msra.mxu0 0
    %300 = vmatprep.subr.bf16.mxu0 0
    %301 = vmatpush2.bf16.msra.mxu0 0
    %302 = vmatprep.subr.bf16.mxu0 0
    %303 = vmatpush2.bf16.msra.mxu0 0
    %304 = vmatprep.subr.bf16.mxu0 0
    %305 = vmatpush2.bf16.msra.mxu0 0
    %306 = vmatprep.subr.bf16.mxu0 0
    %307 = vmatpush2.bf16.msra.mxu0 0
    %308 = vmatprep.subr.bf16.mxu0 0
    %309 = vmatpush2.bf16.msra.mxu0 0
    %310 = vmatprep.subr.bf16.mxu0 0
    %311 = vmatpush2.bf16.msra.mxu0 0
    %312 = vmatprep.mubr.bf16.mxu0 0
    %313 = vmatmul.mubr.bf16.gmra.mxu0 %v278
    %v314 = vpop.f32.mrf.mxu0
    %v315 = vadd.f32 %v263, %v314
    %v316 = vpop.f32.mrf.mxu0
    %v317 = vpop.f32.mrf.mxu0
    %v318 = vpop.f32.mrf.mxu0
    %319 = vdwg.mxu0
    %v320 = vmax.f32 %v315, 0.0
    %v321 = vpack.c.bf16 %v320, %v320
    %v322 = vld [vmem:[#allocation12] sm:$0xf]
    %v323 = vld [vmem:[#allocation12 + $0x4] sm:$0xf]
    %v324 = vld [vmem:[#allocation12 + $0x8] sm:$0xf]
    %v325 = vld [vmem:[#allocation12 + $0xc] sm:$0xf]
    %v326 = vld [vmem:[%s9] sm:$0x1]
    %v328 = vlaneseq
    %v329 = vshrl.u32 %v328, 7
    %v330 = vsub.s32 0, %v329
    %v331 = vrot.slane %v326, %v330
    %v337 = vunpack.c.l.b16 %v322
    %v338 = vunpack.c.l.b16 %v323
    %v339 = vunpack.c.l.b16 %v324
    %v340 = vunpack.c.l.b16 %v325
    %v341 = vpack.c.b16 %v338, %v337
    %v342 = vpack.c.b16 %v340, %v339
    %v346 = vsel %vm208, %v321, 0
    %348 = vmatprep.subr.bf16.mxu0 0
    %349 = vmatpush1.bf16.msra.mxu0 0
    %350 = vmatprep.subr.bf16.mxu0 0
    %351 = vmatpush1.bf16.msra.mxu0 0
    %352 = vmatprep.subr.bf16.mxu0 0
    %353 = vmatpush1.bf16.msra.mxu0 0
    %354 = vmatprep.subr.bf16.mxu0 0
    %355 = vmatpush1.bf16.msra.mxu0 0
    %356 = vmatprep.subr.bf16.mxu0 0
    %357 = vmatpush1.bf16.msra.mxu0 0
    %358 = vmatprep.subr.bf16.mxu0 0
    %359 = vmatpush1.bf16.msra.mxu0 0
    %360 = vmatprep.subr.bf16.mxu0 0
    %361 = vmatpush1.bf16.msra.mxu0 %v342
    %362 = vmatprep.subr.bf16.mxu0 0
    %363 = vmatpush1.bf16.msra.mxu0 %v341
    %364 = vmatprep.subr.bf16.mxu0 0
    %365 = vmatpush2.bf16.msra.mxu0 0
    %366 = vmatprep.subr.bf16.mxu0 0
    %367 = vmatpush2.bf16.msra.mxu0 0
    %368 = vmatprep.subr.bf16.mxu0 0
    %369 = vmatpush2.bf16.msra.mxu0 0
    %370 = vmatprep.subr.bf16.mxu0 0
    %371 = vmatpush2.bf16.msra.mxu0 0
    %372 = vmatprep.subr.bf16.mxu0 0
    %373 = vmatpush2.bf16.msra.mxu0 0
    %374 = vmatprep.subr.bf16.mxu0 0
    %375 = vmatpush2.bf16.msra.mxu0 0
    %376 = vmatprep.subr.bf16.mxu0 0
    %377 = vmatpush2.bf16.msra.mxu0 0
    %378 = vmatprep.subr.bf16.mxu0 0
    %379 = vmatpush2.bf16.msra.mxu0 0
    %380 = vmatprep.mubr.bf16.mxu0 0
    %381 = vmatmul.mubr.bf16.gmra.mxu0 %v346
    %v382 = vpop.f32.mrf.mxu0
    %v383 = vadd.f32 %v331, %v382
    %v384 = vpop.f32.mrf.mxu0
    %v385 = vpop.f32.mrf.mxu0
    %v386 = vpop.f32.mrf.mxu0
    %387 = vdwg.mxu0
    %v388 = vlaneseq
    %v389 = vshrl.u32 %v388, 7
    %v390 = vlaneseq
    %v391 = vand.u32 %v390, 127
    %s392 = smul.u32 0, 8
    %v393 = vstv %s392
    %v394 = vadd.s32 %v393, %v389
    %v395 = vmul.u32 %v394, 128
    %v396 = vadd.s32 %v395, %v391
    %s397 = sld [smem:[#allocation3]]
    %s398 = smul.u32 %s397, 2654435769
    %s399 = sadd.s32 %s398, 1013904223
    %v400 = vstv %s399
    %v401 = vxor.u32 %v396, %v400
    %v402 = vshrl.u32 %v401, 16
    %v403 = vxor.u32 %v401, %v402
    %v404 = vmul.u32 %v403, 2146121005
    %v405 = vshrl.u32 %v404, 15
    %v406 = vxor.u32 %v404, %v405
    %v407 = vmul.u32 %v406, 2221713035
    %v408 = vshrl.u32 %v407, 16
    %v409 = vxor.u32 %v407, %v408
    %v410 = vand.u32 %v409, 8388607
    %v411 = vcvt.s32.f32 %v410
    %v412 = vmul.f32 %v411, 1.1920929e-07
    %v413 = vadd.f32 %v412, 5.9604645e-08
    %v414 = vlog2.pop %v413
    %v415 = vmul.f32 %v414, 0.6931472
    %v416 = vsub.f32 0.0, %v415
    %v417 = vlog2.pop %v416
    %v418 = vmul.f32 %v417, 0.6931472
    %v419 = vsub.f32 %v383, %v418
    %vm420 = vcmp.ge.s32.totalorder %v391, 0
    %vm421 = vcmp.lt.s32.totalorder %v391, 3
    %vm422 = vmand %vm420, %vm421
    %v423 = vsel %vm422, 1, 0
    %vm424 = vcmp.eq.s32.totalorder %v423, 1
    %v425 = vsel %vm424, %v419, -1e+30
    %426 = vmax.xlane.f32.xlu0 %v425
    %v427 = vpop.xlane.xlu0 %426
    %vm428 = vcmp.ge.f32.partialorder %v419, %v427
    %vm429 = vmand %vm424, %vm428
    %v430 = vsel %vm429, %v391, 1073741824
    %v431 = vand.u32 %v430, 65535
    %v432 = vshra.s32 %v430, 16
    %v433 = vcvt.s32.f32 %v431
    %v434 = vcvt.s32.f32 %v432
    %435 = vmin.xlane.f32.xlu0 %v434
    %v436 = vpop.xlane.xlu0 %435
    %vm437 = vcmp.eq.f32.partialorder %v434, %v436
    %v438 = vsel %vm437, %v433, inf
    %439 = vmin.xlane.f32.xlu0 %v438
    %v440 = vpop.xlane.xlu0 %439
    %v441 = vcvt.f32.s32 %v440
    %v442 = vcvt.f32.s32 %v436
    %v443 = vshll.u32 %v442, 16
    %v444 = vadd.s32 %v443, %v441
    %vm445 = vcmp.eq.s32.totalorder %v391, %v444
    %v446 = vsel %vm445, 1, 0
    %v447 = vcvt.s32.f32 %v446
    %v448 = vadd.f32 %v447, 0.0
    %vm449 = vcmp.ge.s32.totalorder %v391, 3
    %vm450 = vcmp.lt.s32.totalorder %v391, 7
    %vm451 = vmand %vm449, %vm450
    %v452 = vsel %vm451, 1, 0
    %vm453 = vcmp.eq.s32.totalorder %v452, 1
    %v454 = vsel %vm453, %v419, -1e+30
    %455 = vmax.xlane.f32.xlu0 %v454
    %v456 = vpop.xlane.xlu0 %455
    %vm457 = vcmp.ge.f32.partialorder %v419, %v456
    %vm458 = vmand %vm453, %vm457
    %v459 = vsel %vm458, %v391, 1073741824
    %v460 = vand.u32 %v459, 65535
    %v461 = vshra.s32 %v459, 16
    %v462 = vcvt.s32.f32 %v460
    %v463 = vcvt.s32.f32 %v461
    %464 = vmin.xlane.f32.xlu0 %v463
    %v465 = vpop.xlane.xlu0 %464
    %vm466 = vcmp.eq.f32.partialorder %v463, %v465
    %v467 = vsel %vm466, %v462, inf
    %468 = vmin.xlane.f32.xlu0 %v467
    %v469 = vpop.xlane.xlu0 %468
    %v470 = vcvt.f32.s32 %v469
    %v471 = vcvt.f32.s32 %v465
    %v472 = vshll.u32 %v471, 16
    %v473 = vadd.s32 %v472, %v470
    %vm474 = vcmp.eq.s32.totalorder %v391, %v473
    %v475 = vsel %vm474, 1, 0
    %v476 = vcvt.s32.f32 %v475
    %v477 = vadd.f32 %v448, %v476
    %vm478 = vcmp.ge.s32.totalorder %v391, 7
    %vm479 = vcmp.lt.s32.totalorder %v391, 12
    %vm480 = vmand %vm478, %vm479
    %v481 = vsel %vm480, 1, 0
    %vm482 = vcmp.eq.s32.totalorder %v481, 1
    %v483 = vsel %vm482, %v419, -1e+30
    %484 = vmax.xlane.f32.xlu0 %v483
    %v485 = vpop.xlane.xlu0 %484
    %vm486 = vcmp.ge.f32.partialorder %v419, %v485
    %vm487 = vmand %vm482, %vm486
    %v488 = vsel %vm487, %v391, 1073741824
    %v489 = vand.u32 %v488, 65535
    %v490 = vshra.s32 %v488, 16
    %v491 = vcvt.s32.f32 %v489
    %v492 = vcvt.s32.f32 %v490
    %493 = vmin.xlane.f32.xlu0 %v492
    %v494 = vpop.xlane.xlu0 %493
    %vm495 = vcmp.eq.f32.partialorder %v492, %v494
    %v496 = vsel %vm495, %v491, inf
    %497 = vmin.xlane.f32.xlu0 %v496
    %v498 = vpop.xlane.xlu0 %497
    %v499 = vcvt.f32.s32 %v498
    %v500 = vcvt.f32.s32 %v494
    %v501 = vshll.u32 %v500, 16
    %v502 = vadd.s32 %v501, %v499
    %vm503 = vcmp.eq.s32.totalorder %v391, %v502
    %v504 = vsel %vm503, 1, 0
    %v505 = vcvt.s32.f32 %v504
    %v506 = vadd.f32 %v477, %v505
    %507 = vmax.xlane.f32.xlu0 %v383
    %v508 = vpop.xlane.xlu0 %507
    %v509 = vsub.f32 %v383, %v508
    %v510 = vmul.f32 %v509, 1.442695
    %v511 = vpow.pop %v510
    %v512 = vld [vmem:[#allocation13] sm:$0xff]
    %v513 = vld [vmem:[#allocation13 + $0x8] sm:$0xff]
    %v514 = vld [vmem:[#allocation13 + $0x10] sm:$0xff]
    %v515 = vld [vmem:[#allocation13 + $0x18] sm:$0xff]
    %v516 = vld [vmem:[#allocation13 + $0x20] sm:$0xff]
    %v517 = vld [vmem:[#allocation13 + $0x28] sm:$0xff]
    %v518 = vld [vmem:[#allocation13 + $0x30] sm:$0xff]
    %v519 = vld [vmem:[#allocation13 + $0x38] sm:$0xff]
    %v520 = vld [vmem:[#allocation13 + $0x40] sm:$0xff]
    %v521 = vld [vmem:[#allocation13 + $0x48] sm:$0xff]
    %v522 = vld [vmem:[#allocation13 + $0x50] sm:$0xff]
    %v523 = vld [vmem:[#allocation13 + $0x58] sm:$0xff]
    %v524 = vld [vmem:[#allocation13 + $0x60] sm:$0xff]
    %v525 = vld [vmem:[#allocation13 + $0x68] sm:$0xff]
    %v526 = vld [vmem:[#allocation13 + $0x70] sm:$0xff]
    %v527 = vld [vmem:[#allocation13 + $0x78] sm:$0xff]
    %528 = vmatprep.subr.mxu0 0.0
    %v529 = vand.u32 %v527, 4294901760
    %530 = vmatpush1.msra.mxu0 %v529
    %531 = vmatprep.subr.mxu0 0.0
    %v532 = vand.u32 %v526, 4294901760
    %533 = vmatpush1.msra.mxu0 %v532
    %534 = vmatprep.subr.mxu0 0.0
    %v535 = vand.u32 %v525, 4294901760
    %536 = vmatpush1.msra.mxu0 %v535
    %537 = vmatprep.subr.mxu0 0.0
    %v538 = vand.u32 %v524, 4294901760
    %539 = vmatpush1.msra.mxu0 %v538
    %540 = vmatprep.subr.mxu0 0.0
    %v541 = vand.u32 %v523, 4294901760
    %542 = vmatpush1.msra.mxu0 %v541
    %543 = vmatprep.subr.mxu0 0.0
    %v544 = vand.u32 %v522, 4294901760
    %545 = vmatpush1.msra.mxu0 %v544
    %546 = vmatprep.subr.mxu0 0.0
    %v547 = vand.u32 %v521, 4294901760
    %548 = vmatpush1.msra.mxu0 %v547
    %549 = vmatprep.subr.mxu0 0.0
    %v550 = vand.u32 %v520, 4294901760
    %551 = vmatpush1.msra.mxu0 %v550
    %552 = vmatprep.subr.mxu0 0.0
    %v553 = vand.u32 %v519, 4294901760
    %554 = vmatpush1.msra.mxu0 %v553
    %555 = vmatprep.subr.mxu0 0.0
    %v556 = vand.u32 %v518, 4294901760
    %557 = vmatpush1.msra.mxu0 %v556
    %558 = vmatprep.subr.mxu0 0.0
    %v559 = vand.u32 %v517, 4294901760
    %560 = vmatpush1.msra.mxu0 %v559
    %561 = vmatprep.subr.mxu0 0.0
    %v562 = vand.u32 %v516, 4294901760
    %563 = vmatpush1.msra.mxu0 %v562
    %564 = vmatprep.subr.mxu0 0.0
    %v565 = vand.u32 %v515, 4294901760
    %566 = vmatpush1.msra.mxu0 %v565
    %567 = vmatprep.subr.mxu0 0.0
    %v568 = vand.u32 %v514, 4294901760
    %569 = vmatpush1.msra.mxu0 %v568
    %570 = vmatprep.subr.mxu0 0.0
    %v571 = vand.u32 %v513, 4294901760
    %572 = vmatpush1.msra.mxu0 %v571
    %573 = vmatprep.subr.mxu0 0.0
    %v574 = vand.u32 %v512, 4294901760
    %575 = vmatpush1.msra.mxu0 %v574
    %576 = vmatprep.subr.mxu0 0.0
    %577 = vmatpush2.msra.mxu0 0.0
    %578 = vmatprep.subr.mxu0 0.0
    %579 = vmatpush2.msra.mxu0 0.0
    %580 = vmatprep.subr.mxu0 0.0
    %581 = vmatpush2.msra.mxu0 0.0
    %582 = vmatprep.subr.mxu0 0.0
    %583 = vmatpush2.msra.mxu0 0.0
    %584 = vmatprep.subr.mxu0 0.0
    %585 = vmatpush2.msra.mxu0 0.0
    %586 = vmatprep.subr.mxu0 0.0
    %587 = vmatpush2.msra.mxu0 0.0
    %588 = vmatprep.subr.mxu0 0.0
    %589 = vmatpush2.msra.mxu0 0.0
    %590 = vmatprep.subr.mxu0 0.0
    %591 = vmatpush2.msra.mxu0 0.0
    %592 = vmatprep.subr.mxu0 0.0
    %593 = vmatpush2.msra.mxu0 0.0
    %594 = vmatprep.subr.mxu0 0.0
    %595 = vmatpush2.msra.mxu0 0.0
    %596 = vmatprep.subr.mxu0 0.0
    %597 = vmatpush2.msra.mxu0 0.0
    %598 = vmatprep.subr.mxu0 0.0
    %599 = vmatpush2.msra.mxu0 0.0
    %600 = vmatprep.subr.mxu0 0.0
    %601 = vmatpush2.msra.mxu0 0.0
    %602 = vmatprep.subr.mxu0 0.0
    %603 = vmatpush2.msra.mxu0 0.0
    %604 = vmatprep.subr.mxu0 0.0
    %605 = vmatpush2.msra.mxu0 0.0
    %606 = vmatprep.subr.mxu0 0.0
    %607 = vmatpush2.msra.mxu0 0.0
    %608 = vmatprep.mubr.f32.mxu0 0.0
    %v609 = vand.u32 %v511, 4294901760
    %v610 = vsub.f32 %v511, %v609
    %v611 = vand.u32 %v610, 4294901760
    %v612 = vsub.f32 %v610, %v611
    %v613 = vand.u32 %v612, 4294901760
    %614 = vmatmul.mubr.f32.gmra.mxu0 %v613
    %v615 = vpop.f32.mrf.mxu0
    %v616 = vadd.f32 0.0, %v615
    %v617 = vpop.f32.mrf.mxu0
    %618 = vdwg.mxu0
    %619 = vmatprep.subr.mxu0 0.0
    %v620 = vand.u32 %v527, 4294901760
    %v621 = vsub.f32 %v527, %v620
    %v622 = vand.u32 %v621, 4294901760
    %v623 = vsub.f32 %v621, %v622
    %v624 = vand.u32 %v623, 4294901760
    %625 = vmatpush1.msra.mxu0 %v624
    %626 = vmatprep.subr.mxu0 0.0
    %v627 = vand.u32 %v526, 4294901760
    %v628 = vsub.f32 %v526, %v627
    %v629 = vand.u32 %v628, 4294901760
    %v630 = vsub.f32 %v628, %v629
    %v631 = vand.u32 %v630, 4294901760
    %632 = vmatpush1.msra.mxu0 %v631
    %633 = vmatprep.subr.mxu0 0.0
    %v634 = vand.u32 %v525, 4294901760
    %v635 = vsub.f32 %v525, %v634
    %v636 = vand.u32 %v635, 4294901760
    %v637 = vsub.f32 %v635, %v636
    %v638 = vand.u32 %v637, 4294901760
    %639 = vmatpush1.msra.mxu0 %v638
    %640 = vmatprep.subr.mxu0 0.0
    %v641 = vand.u32 %v524, 4294901760
    %v642 = vsub.f32 %v524, %v641
    %v643 = vand.u32 %v642, 4294901760
    %v644 = vsub.f32 %v642, %v643
    %v645 = vand.u32 %v644, 4294901760
    %646 = vmatpush1.msra.mxu0 %v645
    %647 = vmatprep.subr.mxu0 0.0
    %v648 = vand.u32 %v523, 4294901760
    %v649 = vsub.f32 %v523, %v648
    %v650 = vand.u32 %v649, 4294901760
    %v651 = vsub.f32 %v649, %v650
    %v652 = vand.u32 %v651, 4294901760
    %653 = vmatpush1.msra.mxu0 %v652
    %654 = vmatprep.subr.mxu0 0.0
    %v655 = vand.u32 %v522, 4294901760
    %v656 = vsub.f32 %v522, %v655
    %v657 = vand.u32 %v656, 4294901760
    %v658 = vsub.f32 %v656, %v657
    %v659 = vand.u32 %v658, 4294901760
    %660 = vmatpush1.msra.mxu0 %v659
    %661 = vmatprep.subr.mxu0 0.0
    %v662 = vand.u32 %v521, 4294901760
    %v663 = vsub.f32 %v521, %v662
    %v664 = vand.u32 %v663, 4294901760
    %v665 = vsub.f32 %v663, %v664
    %v666 = vand.u32 %v665, 4294901760
    %667 = vmatpush1.msra.mxu0 %v666
    %668 = vmatprep.subr.mxu0 0.0
    %v669 = vand.u32 %v520, 4294901760
    %v670 = vsub.f32 %v520, %v669
    %v671 = vand.u32 %v670, 4294901760
    %v672 = vsub.f32 %v670, %v671
    %v673 = vand.u32 %v672, 4294901760
    %674 = vmatpush1.msra.mxu0 %v673
    %675 = vmatprep.subr.mxu0 0.0
    %v676 = vand.u32 %v519, 4294901760
    %v677 = vsub.f32 %v519, %v676
    %v678 = vand.u32 %v677, 4294901760
    %v679 = vsub.f32 %v677, %v678
    %v680 = vand.u32 %v679, 4294901760
    %681 = vmatpush1.msra.mxu0 %v680
    %682 = vmatprep.subr.mxu0 0.0
    %v683 = vand.u32 %v518, 4294901760
    %v684 = vsub.f32 %v518, %v683
    %v685 = vand.u32 %v684, 4294901760
    %v686 = vsub.f32 %v684, %v685
    %v687 = vand.u32 %v686, 4294901760
    %688 = vmatpush1.msra.mxu0 %v687
    %689 = vmatprep.subr.mxu0 0.0
    %v690 = vand.u32 %v517, 4294901760
    %v691 = vsub.f32 %v517, %v690
    %v692 = vand.u32 %v691, 4294901760
    %v693 = vsub.f32 %v691, %v692
    %v694 = vand.u32 %v693, 4294901760
    %695 = vmatpush1.msra.mxu0 %v694
    %696 = vmatprep.subr.mxu0 0.0
    %v697 = vand.u32 %v516, 4294901760
    %v698 = vsub.f32 %v516, %v697
    %v699 = vand.u32 %v698, 4294901760
    %v700 = vsub.f32 %v698, %v699
    %v701 = vand.u32 %v700, 4294901760
    %702 = vmatpush1.msra.mxu0 %v701
    %703 = vmatprep.subr.mxu0 0.0
    %v704 = vand.u32 %v515, 4294901760
    %v705 = vsub.f32 %v515, %v704
    %v706 = vand.u32 %v705, 4294901760
    %v707 = vsub.f32 %v705, %v706
    %v708 = vand.u32 %v707, 4294901760
    %709 = vmatpush1.msra.mxu0 %v708
    %710 = vmatprep.subr.mxu0 0.0
    %v711 = vand.u32 %v514, 4294901760
    %v712 = vsub.f32 %v514, %v711
    %v713 = vand.u32 %v712, 4294901760
    %v714 = vsub.f32 %v712, %v713
    %v715 = vand.u32 %v714, 4294901760
    %716 = vmatpush1.msra.mxu0 %v715
    %717 = vmatprep.subr.mxu0 0.0
    %v718 = vand.u32 %v513, 4294901760
    %v719 = vsub.f32 %v513, %v718
    %v720 = vand.u32 %v719, 4294901760
    %v721 = vsub.f32 %v719, %v720
    %v722 = vand.u32 %v721, 4294901760
    %723 = vmatpush1.msra.mxu0 %v722
    %724 = vmatprep.subr.mxu0 0.0
    %v725 = vand.u32 %v512, 4294901760
    %v726 = vsub.f32 %v512, %v725
    %v727 = vand.u32 %v726, 4294901760
    %v728 = vsub.f32 %v726, %v727
    %v729 = vand.u32 %v728, 4294901760
    %730 = vmatpush1.msra.mxu0 %v729
    %731 = vmatprep.subr.mxu0 0.0
    %732 = vmatpush2.msra.mxu0 0.0
    %733 = vmatprep.subr.mxu0 0.0
    %734 = vmatpush2.msra.mxu0 0.0
    %735 = vmatprep.subr.mxu0 0.0
    %736 = vmatpush2.msra.mxu0 0.0
    %737 = vmatprep.subr.mxu0 0.0
    %738 = vmatpush2.msra.mxu0 0.0
    %739 = vmatprep.subr.mxu0 0.0
    %740 = vmatpush2.msra.mxu0 0.0
    %741 = vmatprep.subr.mxu0 0.0
    %742 = vmatpush2.msra.mxu0 0.0
    %743 = vmatprep.subr.mxu0 0.0
    %744 = vmatpush2.msra.mxu0 0.0
    %745 = vmatprep.subr.mxu0 0.0
    %746 = vmatpush2.msra.mxu0 0.0
    %747 = vmatprep.subr.mxu0 0.0
    %748 = vmatpush2.msra.mxu0 0.0
    %749 = vmatprep.subr.mxu0 0.0
    %750 = vmatpush2.msra.mxu0 0.0
    %751 = vmatprep.subr.mxu0 0.0
    %752 = vmatpush2.msra.mxu0 0.0
    %753 = vmatprep.subr.mxu0 0.0
    %754 = vmatpush2.msra.mxu0 0.0
    %755 = vmatprep.subr.mxu0 0.0
    %756 = vmatpush2.msra.mxu0 0.0
    %757 = vmatprep.subr.mxu0 0.0
    %758 = vmatpush2.msra.mxu0 0.0
    %759 = vmatprep.subr.mxu0 0.0
    %760 = vmatpush2.msra.mxu0 0.0
    %761 = vmatprep.subr.mxu0 0.0
    %762 = vmatpush2.msra.mxu0 0.0
    %763 = vmatprep.mubr.f32.mxu0 0.0
    %v764 = vand.u32 %v511, 4294901760
    %765 = vmatmul.mubr.f32.gmra.mxu0 %v764
    %v766 = vpop.f32.mrf.mxu0
    %v767 = vadd.f32 %v616, %v766
    %v768 = vpop.f32.mrf.mxu0
    %769 = vdwg.mxu0
    %770 = vmatprep.subr.mxu0 0.0
    %v771 = vand.u32 %v527, 4294901760
    %v772 = vsub.f32 %v527, %v771
    %773 = vmatpush1.msra.mxu0 %v772
    %774 = vmatprep.subr.mxu0 0.0
    %v775 = vand.u32 %v526, 4294901760
    %v776 = vsub.f32 %v526, %v775
    %777 = vmatpush1.msra.mxu0 %v776
    %778 = vmatprep.subr.mxu0 0.0
    %v779 = vand.u32 %v525, 4294901760
    %v780 = vsub.f32 %v525, %v779
    %781 = vmatpush1.msra.mxu0 %v780
    %782 = vmatprep.subr.mxu0 0.0
    %v783 = vand.u32 %v524, 4294901760
    %v784 = vsub.f32 %v524, %v783
    %785 = vmatpush1.msra.mxu0 %v784
    %786 = vmatprep.subr.mxu0 0.0
    %v787 = vand.u32 %v523, 4294901760
    %v788 = vsub.f32 %v523, %v787
    %789 = vmatpush1.msra.mxu0 %v788
    %790 = vmatprep.subr.mxu0 0.0
    %v791 = vand.u32 %v522, 4294901760
    %v792 = vsub.f32 %v522, %v791
    %793 = vmatpush1.msra.mxu0 %v792
    %794 = vmatprep.subr.mxu0 0.0
    %v795 = vand.u32 %v521, 4294901760
    %v796 = vsub.f32 %v521, %v795
    %797 = vmatpush1.msra.mxu0 %v796
    %798 = vmatprep.subr.mxu0 0.0
    %v799 = vand.u32 %v520, 4294901760
    %v800 = vsub.f32 %v520, %v799
    %801 = vmatpush1.msra.mxu0 %v800
    %802 = vmatprep.subr.mxu0 0.0
    %v803 = vand.u32 %v519, 4294901760
    %v804 = vsub.f32 %v519, %v803
    %805 = vmatpush1.msra.mxu0 %v804
    %806 = vmatprep.subr.mxu0 0.0
    %v807 = vand.u32 %v518, 4294901760
    %v808 = vsub.f32 %v518, %v807
    %809 = vmatpush1.msra.mxu0 %v808
    %810 = vmatprep.subr.mxu0 0.0
    %v811 = vand.u32 %v517, 4294901760
    %v812 = vsub.f32 %v517, %v811
    %813 = vmatpush1.msra.mxu0 %v812
    %814 = vmatprep.subr.mxu0 0.0
    %v815 = vand.u32 %v516, 4294901760
    %v816 = vsub.f32 %v516, %v815
    %817 = vmatpush1.msra.mxu0 %v816
    %818 = vmatprep.subr.mxu0 0.0
    %v819 = vand.u32 %v515, 4294901760
    %v820 = vsub.f32 %v515, %v819
    %821 = vmatpush1.msra.mxu0 %v820
    %822 = vmatprep.subr.mxu0 0.0
    %v823 = vand.u32 %v514, 4294901760
    %v824 = vsub.f32 %v514, %v823
    %825 = vmatpush1.msra.mxu0 %v824
    %826 = vmatprep.subr.mxu0 0.0
    %v827 = vand.u32 %v513, 4294901760
    %v828 = vsub.f32 %v513, %v827
    %829 = vmatpush1.msra.mxu0 %v828
    %830 = vmatprep.subr.mxu0 0.0
    %v831 = vand.u32 %v512, 4294901760
    %v832 = vsub.f32 %v512, %v831
    %833 = vmatpush1.msra.mxu0 %v832
    %834 = vmatprep.subr.mxu0 0.0
    %835 = vmatpush2.msra.mxu0 0.0
    %836 = vmatprep.subr.mxu0 0.0
    %837 = vmatpush2.msra.mxu0 0.0
    %838 = vmatprep.subr.mxu0 0.0
    %839 = vmatpush2.msra.mxu0 0.0
    %840 = vmatprep.subr.mxu0 0.0
    %841 = vmatpush2.msra.mxu0 0.0
    %842 = vmatprep.subr.mxu0 0.0
    %843 = vmatpush2.msra.mxu0 0.0
    %844 = vmatprep.subr.mxu0 0.0
    %845 = vmatpush2.msra.mxu0 0.0
    %846 = vmatprep.subr.mxu0 0.0
    %847 = vmatpush2.msra.mxu0 0.0
    %848 = vmatprep.subr.mxu0 0.0
    %849 = vmatpush2.msra.mxu0 0.0
    %850 = vmatprep.subr.mxu0 0.0
    %851 = vmatpush2.msra.mxu0 0.0
    %852 = vmatprep.subr.mxu0 0.0
    %853 = vmatpush2.msra.mxu0 0.0
    %854 = vmatprep.subr.mxu0 0.0
    %855 = vmatpush2.msra.mxu0 0.0
    %856 = vmatprep.subr.mxu0 0.0
    %857 = vmatpush2.msra.mxu0 0.0
    %858 = vmatprep.subr.mxu0 0.0
    %859 = vmatpush2.msra.mxu0 0.0
    %860 = vmatprep.subr.mxu0 0.0
    %861 = vmatpush2.msra.mxu0 0.0
    %862 = vmatprep.subr.mxu0 0.0
    %863 = vmatpush2.msra.mxu0 0.0
    %864 = vmatprep.subr.mxu0 0.0
    %865 = vmatpush2.msra.mxu0 0.0
    %866 = vmatprep.mubr.f32.mxu0 0.0
    %v867 = vand.u32 %v511, 4294901760
    %v868 = vsub.f32 %v511, %v867
    %869 = vmatmul.mubr.f32.gmra.mxu0 %v868
    %v870 = vpop.f32.mrf.mxu0
    %v871 = vadd.f32 %v767, %v870
    %v872 = vpop.f32.mrf.mxu0
    %873 = vdwg.mxu0
    %874 = vmatprep.subr.mxu0 0.0
    %v875 = vand.u32 %v527, 4294901760
    %876 = vmatpush1.msra.mxu0 %v875
    %877 = vmatprep.subr.mxu0 0.0
    %v878 = vand.u32 %v526, 4294901760
    %879 = vmatpush1.msra.mxu0 %v878
    %880 = vmatprep.subr.mxu0 0.0
    %v881 = vand.u32 %v525, 4294901760
    %882 = vmatpush1.msra.mxu0 %v881
    %883 = vmatprep.subr.mxu0 0.0
    %v884 = vand.u32 %v524, 4294901760
    %885 = vmatpush1.msra.mxu0 %v884
    %886 = vmatprep.subr.mxu0 0.0
    %v887 = vand.u32 %v523, 4294901760
    %888 = vmatpush1.msra.mxu0 %v887
    %889 = vmatprep.subr.mxu0 0.0
    %v890 = vand.u32 %v522, 4294901760
    %891 = vmatpush1.msra.mxu0 %v890
    %892 = vmatprep.subr.mxu0 0.0
    %v893 = vand.u32 %v521, 4294901760
    %894 = vmatpush1.msra.mxu0 %v893
    %895 = vmatprep.subr.mxu0 0.0
    %v896 = vand.u32 %v520, 4294901760
    %897 = vmatpush1.msra.mxu0 %v896
    %898 = vmatprep.subr.mxu0 0.0
    %v899 = vand.u32 %v519, 4294901760
    %900 = vmatpush1.msra.mxu0 %v899
    %901 = vmatprep.subr.mxu0 0.0
    %v902 = vand.u32 %v518, 4294901760
    %903 = vmatpush1.msra.mxu0 %v902
    %904 = vmatprep.subr.mxu0 0.0
    %v905 = vand.u32 %v517, 4294901760
    %906 = vmatpush1.msra.mxu0 %v905
    %907 = vmatprep.subr.mxu0 0.0
    %v908 = vand.u32 %v516, 4294901760
    %909 = vmatpush1.msra.mxu0 %v908
    %910 = vmatprep.subr.mxu0 0.0
    %v911 = vand.u32 %v515, 4294901760
    %912 = vmatpush1.msra.mxu0 %v911
    %913 = vmatprep.subr.mxu0 0.0
    %v914 = vand.u32 %v514, 4294901760
    %915 = vmatpush1.msra.mxu0 %v914
    %916 = vmatprep.subr.mxu0 0.0
    %v917 = vand.u32 %v513, 4294901760
    %918 = vmatpush1.msra.mxu0 %v917
    %919 = vmatprep.subr.mxu0 0.0
    %v920 = vand.u32 %v512, 4294901760
    %921 = vmatpush1.msra.mxu0 %v920
    %922 = vmatprep.subr.mxu0 0.0
    %923 = vmatpush2.msra.mxu0 0.0
    %924 = vmatprep.subr.mxu0 0.0
    %925 = vmatpush2.msra.mxu0 0.0
    %926 = vmatprep.subr.mxu0 0.0
    %927 = vmatpush2.msra.mxu0 0.0
    %928 = vmatprep.subr.mxu0 0.0
    %929 = vmatpush2.msra.mxu0 0.0
    %930 = vmatprep.subr.mxu0 0.0
    %931 = vmatpush2.msra.mxu0 0.0
    %932 = vmatprep.subr.mxu0 0.0
    %933 = vmatpush2.msra.mxu0 0.0
    %934 = vmatprep.subr.mxu0 0.0
    %935 = vmatpush2.msra.mxu0 0.0
    %936 = vmatprep.subr.mxu0 0.0
    %937 = vmatpush2.msra.mxu0 0.0
    %938 = vmatprep.subr.mxu0 0.0
    %939 = vmatpush2.msra.mxu0 0.0
    %940 = vmatprep.subr.mxu0 0.0
    %941 = vmatpush2.msra.mxu0 0.0
    %942 = vmatprep.subr.mxu0 0.0
    %943 = vmatpush2.msra.mxu0 0.0
    %944 = vmatprep.subr.mxu0 0.0
    %945 = vmatpush2.msra.mxu0 0.0
    %946 = vmatprep.subr.mxu0 0.0
    %947 = vmatpush2.msra.mxu0 0.0
    %948 = vmatprep.subr.mxu0 0.0
    %949 = vmatpush2.msra.mxu0 0.0
    %950 = vmatprep.subr.mxu0 0.0
    %951 = vmatpush2.msra.mxu0 0.0
    %952 = vmatprep.subr.mxu0 0.0
    %953 = vmatpush2.msra.mxu0 0.0
    %954 = vmatprep.mubr.f32.mxu0 0.0
    %v955 = vand.u32 %v511, 4294901760
    %v956 = vsub.f32 %v511, %v955
    %v957 = vand.u32 %v956, 4294901760
    %958 = vmatmul.mubr.f32.gmra.mxu0 %v957
    %v959 = vpop.f32.mrf.mxu0
    %v960 = vadd.f32 %v871, %v959
    %v961 = vpop.f32.mrf.mxu0
    %962 = vdwg.mxu0
    %963 = vmatprep.subr.mxu0 0.0
    %v964 = vand.u32 %v527, 4294901760
    %v965 = vsub.f32 %v527, %v964
    %v966 = vand.u32 %v965, 4294901760
    %967 = vmatpush1.msra.mxu0 %v966
    %968 = vmatprep.subr.mxu0 0.0
    %v969 = vand.u32 %v526, 4294901760
    %v970 = vsub.f32 %v526, %v969
    %v971 = vand.u32 %v970, 4294901760
    %972 = vmatpush1.msra.mxu0 %v971
    %973 = vmatprep.subr.mxu0 0.0
    %v974 = vand.u32 %v525, 4294901760
    %v975 = vsub.f32 %v525, %v974
    %v976 = vand.u32 %v975, 4294901760
    %977 = vmatpush1.msra.mxu0 %v976
    %978 = vmatprep.subr.mxu0 0.0
    %v979 = vand.u32 %v524, 4294901760
    %v980 = vsub.f32 %v524, %v979
    %v981 = vand.u32 %v980, 4294901760
    %982 = vmatpush1.msra.mxu0 %v981
    %983 = vmatprep.subr.mxu0 0.0
    %v984 = vand.u32 %v523, 4294901760
    %v985 = vsub.f32 %v523, %v984
    %v986 = vand.u32 %v985, 4294901760
    %987 = vmatpush1.msra.mxu0 %v986
    %988 = vmatprep.subr.mxu0 0.0
    %v989 = vand.u32 %v522, 4294901760
    %v990 = vsub.f32 %v522, %v989
    %v991 = vand.u32 %v990, 4294901760
    %992 = vmatpush1.msra.mxu0 %v991
    %993 = vmatprep.subr.mxu0 0.0
    %v994 = vand.u32 %v521, 4294901760
    %v995 = vsub.f32 %v521, %v994
    %v996 = vand.u32 %v995, 4294901760
    %997 = vmatpush1.msra.mxu0 %v996
    %998 = vmatprep.subr.mxu0 0.0
    %v999 = vand.u32 %v520, 4294901760
    %v1000 = vsub.f32 %v520, %v999
    %v1001 = vand.u32 %v1000, 4294901760
    %1002 = vmatpush1.msra.mxu0 %v1001
    %1003 = vmatprep.subr.mxu0 0.0
    %v1004 = vand.u32 %v519, 4294901760
    %v1005 = vsub.f32 %v519, %v1004
    %v1006 = vand.u32 %v1005, 4294901760
    %1007 = vmatpush1.msra.mxu0 %v1006
    %1008 = vmatprep.subr.mxu0 0.0
    %v1009 = vand.u32 %v518, 4294901760
    %v1010 = vsub.f32 %v518, %v1009
    %v1011 = vand.u32 %v1010, 4294901760
    %1012 = vmatpush1.msra.mxu0 %v1011
    %1013 = vmatprep.subr.mxu0 0.0
    %v1014 = vand.u32 %v517, 4294901760
    %v1015 = vsub.f32 %v517, %v1014
    %v1016 = vand.u32 %v1015, 4294901760
    %1017 = vmatpush1.msra.mxu0 %v1016
    %1018 = vmatprep.subr.mxu0 0.0
    %v1019 = vand.u32 %v516, 4294901760
    %v1020 = vsub.f32 %v516, %v1019
    %v1021 = vand.u32 %v1020, 4294901760
    %1022 = vmatpush1.msra.mxu0 %v1021
    %1023 = vmatprep.subr.mxu0 0.0
    %v1024 = vand.u32 %v515, 4294901760
    %v1025 = vsub.f32 %v515, %v1024
    %v1026 = vand.u32 %v1025, 4294901760
    %1027 = vmatpush1.msra.mxu0 %v1026
    %1028 = vmatprep.subr.mxu0 0.0
    %v1029 = vand.u32 %v514, 4294901760
    %v1030 = vsub.f32 %v514, %v1029
    %v1031 = vand.u32 %v1030, 4294901760
    %1032 = vmatpush1.msra.mxu0 %v1031
    %1033 = vmatprep.subr.mxu0 0.0
    %v1034 = vand.u32 %v513, 4294901760
    %v1035 = vsub.f32 %v513, %v1034
    %v1036 = vand.u32 %v1035, 4294901760
    %1037 = vmatpush1.msra.mxu0 %v1036
    %1038 = vmatprep.subr.mxu0 0.0
    %v1039 = vand.u32 %v512, 4294901760
    %v1040 = vsub.f32 %v512, %v1039
    %v1041 = vand.u32 %v1040, 4294901760
    %1042 = vmatpush1.msra.mxu0 %v1041
    %1043 = vmatprep.subr.mxu0 0.0
    %1044 = vmatpush2.msra.mxu0 0.0
    %1045 = vmatprep.subr.mxu0 0.0
    %1046 = vmatpush2.msra.mxu0 0.0
    %1047 = vmatprep.subr.mxu0 0.0
    %1048 = vmatpush2.msra.mxu0 0.0
    %1049 = vmatprep.subr.mxu0 0.0
    %1050 = vmatpush2.msra.mxu0 0.0
    %1051 = vmatprep.subr.mxu0 0.0
    %1052 = vmatpush2.msra.mxu0 0.0
    %1053 = vmatprep.subr.mxu0 0.0
    %1054 = vmatpush2.msra.mxu0 0.0
    %1055 = vmatprep.subr.mxu0 0.0
    %1056 = vmatpush2.msra.mxu0 0.0
    %1057 = vmatprep.subr.mxu0 0.0
    %1058 = vmatpush2.msra.mxu0 0.0
    %1059 = vmatprep.subr.mxu0 0.0
    %1060 = vmatpush2.msra.mxu0 0.0
    %1061 = vmatprep.subr.mxu0 0.0
    %1062 = vmatpush2.msra.mxu0 0.0
    %1063 = vmatprep.subr.mxu0 0.0
    %1064 = vmatpush2.msra.mxu0 0.0
    %1065 = vmatprep.subr.mxu0 0.0
    %1066 = vmatpush2.msra.mxu0 0.0
    %1067 = vmatprep.subr.mxu0 0.0
    %1068 = vmatpush2.msra.mxu0 0.0
    %1069 = vmatprep.subr.mxu0 0.0
    %1070 = vmatpush2.msra.mxu0 0.0
    %1071 = vmatprep.subr.mxu0 0.0
    %1072 = vmatpush2.msra.mxu0 0.0
    %1073 = vmatprep.subr.mxu0 0.0
    %1074 = vmatpush2.msra.mxu0 0.0
    %1075 = vmatprep.mubr.f32.mxu0 0.0
    %v1076 = vand.u32 %v511, 4294901760
    %1077 = vmatmul.mubr.f32.gmra.mxu0 %v1076
    %v1078 = vpop.f32.mrf.mxu0
    %v1079 = vadd.f32 %v960, %v1078
    %v1080 = vpop.f32.mrf.mxu0
    %1081 = vdwg.mxu0
    %1082 = vmatprep.subr.mxu0 0.0
    %v1083 = vand.u32 %v527, 4294901760
    %1084 = vmatpush1.msra.mxu0 %v1083
    %1085 = vmatprep.subr.mxu0 0.0
    %v1086 = vand.u32 %v526, 4294901760
    %1087 = vmatpush1.msra.mxu0 %v1086
    %1088 = vmatprep.subr.mxu0 0.0
    %v1089 = vand.u32 %v525, 4294901760
    %1090 = vmatpush1.msra.mxu0 %v1089
    %1091 = vmatprep.subr.mxu0 0.0
    %v1092 = vand.u32 %v524, 4294901760
    %1093 = vmatpush1.msra.mxu0 %v1092
    %1094 = vmatprep.subr.mxu0 0.0
    %v1095 = vand.u32 %v523, 4294901760
    %1096 = vmatpush1.msra.mxu0 %v1095
    %1097 = vmatprep.subr.mxu0 0.0
    %v1098 = vand.u32 %v522, 4294901760
    %1099 = vmatpush1.msra.mxu0 %v1098
    %1100 = vmatprep.subr.mxu0 0.0
    %v1101 = vand.u32 %v521, 4294901760
    %1102 = vmatpush1.msra.mxu0 %v1101
    %1103 = vmatprep.subr.mxu0 0.0
    %v1104 = vand.u32 %v520, 4294901760
    %1105 = vmatpush1.msra.mxu0 %v1104
    %1106 = vmatprep.subr.mxu0 0.0
    %v1107 = vand.u32 %v519, 4294901760
    %1108 = vmatpush1.msra.mxu0 %v1107
    %1109 = vmatprep.subr.mxu0 0.0
    %v1110 = vand.u32 %v518, 4294901760
    %1111 = vmatpush1.msra.mxu0 %v1110
    %1112 = vmatprep.subr.mxu0 0.0
    %v1113 = vand.u32 %v517, 4294901760
    %1114 = vmatpush1.msra.mxu0 %v1113
    %1115 = vmatprep.subr.mxu0 0.0
    %v1116 = vand.u32 %v516, 4294901760
    %1117 = vmatpush1.msra.mxu0 %v1116
    %1118 = vmatprep.subr.mxu0 0.0
    %v1119 = vand.u32 %v515, 4294901760
    %1120 = vmatpush1.msra.mxu0 %v1119
    %1121 = vmatprep.subr.mxu0 0.0
    %v1122 = vand.u32 %v514, 4294901760
    %1123 = vmatpush1.msra.mxu0 %v1122
    %1124 = vmatprep.subr.mxu0 0.0
    %v1125 = vand.u32 %v513, 4294901760
    %1126 = vmatpush1.msra.mxu0 %v1125
    %1127 = vmatprep.subr.mxu0 0.0
    %v1128 = vand.u32 %v512, 4294901760
    %1129 = vmatpush1.msra.mxu0 %v1128
    %1130 = vmatprep.subr.mxu0 0.0
    %1131 = vmatpush2.msra.mxu0 0.0
    %1132 = vmatprep.subr.mxu0 0.0
    %1133 = vmatpush2.msra.mxu0 0.0
    %1134 = vmatprep.subr.mxu0 0.0
    %1135 = vmatpush2.msra.mxu0 0.0
    %1136 = vmatprep.subr.mxu0 0.0
    %1137 = vmatpush2.msra.mxu0 0.0
    %1138 = vmatprep.subr.mxu0 0.0
    %1139 = vmatpush2.msra.mxu0 0.0
    %1140 = vmatprep.subr.mxu0 0.0
    %1141 = vmatpush2.msra.mxu0 0.0
    %1142 = vmatprep.subr.mxu0 0.0
    %1143 = vmatpush2.msra.mxu0 0.0
    %1144 = vmatprep.subr.mxu0 0.0
    %1145 = vmatpush2.msra.mxu0 0.0
    %1146 = vmatprep.subr.mxu0 0.0
    %1147 = vmatpush2.msra.mxu0 0.0
    %1148 = vmatprep.subr.mxu0 0.0
    %1149 = vmatpush2.msra.mxu0 0.0
    %1150 = vmatprep.subr.mxu0 0.0
    %1151 = vmatpush2.msra.mxu0 0.0
    %1152 = vmatprep.subr.mxu0 0.0
    %1153 = vmatpush2.msra.mxu0 0.0
    %1154 = vmatprep.subr.mxu0 0.0
    %1155 = vmatpush2.msra.mxu0 0.0
    %1156 = vmatprep.subr.mxu0 0.0
    %1157 = vmatpush2.msra.mxu0 0.0
    %1158 = vmatprep.subr.mxu0 0.0
    %1159 = vmatpush2.msra.mxu0 0.0
    %1160 = vmatprep.subr.mxu0 0.0
    %1161 = vmatpush2.msra.mxu0 0.0
    %1162 = vmatprep.mubr.f32.mxu0 0.0
    %v1163 = vand.u32 %v511, 4294901760
    %1164 = vmatmul.mubr.f32.gmra.mxu0 %v1163
    %v1165 = vpop.f32.mrf.mxu0
    %v1166 = vadd.f32 %v1079, %v1165
    %v1167 = vpop.f32.mrf.mxu0
    %1168 = vdwg.mxu0
    %v1169 = vmul.f32 %v383, %v506
    %1170 = vmatprep.subr.mxu0 0.0
    %v1171 = vand.u32 %v527, 4294901760
    %1172 = vmatpush1.msra.mxu0 %v1171
    %1173 = vmatprep.subr.mxu0 0.0
    %v1174 = vand.u32 %v526, 4294901760
    %1175 = vmatpush1.msra.mxu0 %v1174
    %1176 = vmatprep.subr.mxu0 0.0
    %v1177 = vand.u32 %v525, 4294901760
    %1178 = vmatpush1.msra.mxu0 %v1177
    %1179 = vmatprep.subr.mxu0 0.0
    %v1180 = vand.u32 %v524, 4294901760
    %1181 = vmatpush1.msra.mxu0 %v1180
    %1182 = vmatprep.subr.mxu0 0.0
    %v1183 = vand.u32 %v523, 4294901760
    %1184 = vmatpush1.msra.mxu0 %v1183
    %1185 = vmatprep.subr.mxu0 0.0
    %v1186 = vand.u32 %v522, 4294901760
    %1187 = vmatpush1.msra.mxu0 %v1186
    %1188 = vmatprep.subr.mxu0 0.0
    %v1189 = vand.u32 %v521, 4294901760
    %1190 = vmatpush1.msra.mxu0 %v1189
    %1191 = vmatprep.subr.mxu0 0.0
    %v1192 = vand.u32 %v520, 4294901760
    %1193 = vmatpush1.msra.mxu0 %v1192
    %1194 = vmatprep.subr.mxu0 0.0
    %v1195 = vand.u32 %v519, 4294901760
    %1196 = vmatpush1.msra.mxu0 %v1195
    %1197 = vmatprep.subr.mxu0 0.0
    %v1198 = vand.u32 %v518, 4294901760
    %1199 = vmatpush1.msra.mxu0 %v1198
    %1200 = vmatprep.subr.mxu0 0.0
    %v1201 = vand.u32 %v517, 4294901760
    %1202 = vmatpush1.msra.mxu0 %v1201
    %1203 = vmatprep.subr.mxu0 0.0
    %v1204 = vand.u32 %v516, 4294901760
    %1205 = vmatpush1.msra.mxu0 %v1204
    %1206 = vmatprep.subr.mxu0 0.0
    %v1207 = vand.u32 %v515, 4294901760
    %1208 = vmatpush1.msra.mxu0 %v1207
    %1209 = vmatprep.subr.mxu0 0.0
    %v1210 = vand.u32 %v514, 4294901760
    %1211 = vmatpush1.msra.mxu0 %v1210
    %1212 = vmatprep.subr.mxu0 0.0
    %v1213 = vand.u32 %v513, 4294901760
    %1214 = vmatpush1.msra.mxu0 %v1213
    %1215 = vmatprep.subr.mxu0 0.0
    %v1216 = vand.u32 %v512, 4294901760
    %1217 = vmatpush1.msra.mxu0 %v1216
    %1218 = vmatprep.subr.mxu0 0.0
    %1219 = vmatpush2.msra.mxu0 0.0
    %1220 = vmatprep.subr.mxu0 0.0
    %1221 = vmatpush2.msra.mxu0 0.0
    %1222 = vmatprep.subr.mxu0 0.0
    %1223 = vmatpush2.msra.mxu0 0.0
    %1224 = vmatprep.subr.mxu0 0.0
    %1225 = vmatpush2.msra.mxu0 0.0
    %1226 = vmatprep.subr.mxu0 0.0
    %1227 = vmatpush2.msra.mxu0 0.0
    %1228 = vmatprep.subr.mxu0 0.0
    %1229 = vmatpush2.msra.mxu0 0.0
    %1230 = vmatprep.subr.mxu0 0.0
    %1231 = vmatpush2.msra.mxu0 0.0
    %1232 = vmatprep.subr.mxu0 0.0
    %1233 = vmatpush2.msra.mxu0 0.0
    %1234 = vmatprep.subr.mxu0 0.0
    %1235 = vmatpush2.msra.mxu0 0.0
    %1236 = vmatprep.subr.mxu0 0.0
    %1237 = vmatpush2.msra.mxu0 0.0
    %1238 = vmatprep.subr.mxu0 0.0
    %1239 = vmatpush2.msra.mxu0 0.0
    %1240 = vmatprep.subr.mxu0 0.0
    %1241 = vmatpush2.msra.mxu0 0.0
    %1242 = vmatprep.subr.mxu0 0.0
    %1243 = vmatpush2.msra.mxu0 0.0
    %1244 = vmatprep.subr.mxu0 0.0
    %1245 = vmatpush2.msra.mxu0 0.0
    %1246 = vmatprep.subr.mxu0 0.0
    %1247 = vmatpush2.msra.mxu0 0.0
    %1248 = vmatprep.subr.mxu0 0.0
    %1249 = vmatpush2.msra.mxu0 0.0
    %1250 = vmatprep.mubr.f32.mxu0 0.0
    %v1251 = vand.u32 %v1169, 4294901760
    %v1252 = vsub.f32 %v1169, %v1251
    %v1253 = vand.u32 %v1252, 4294901760
    %v1254 = vsub.f32 %v1252, %v1253
    %v1255 = vand.u32 %v1254, 4294901760
    %1256 = vmatmul.mubr.f32.gmra.mxu0 %v1255
    %v1257 = vpop.f32.mrf.mxu0
    %v1258 = vadd.f32 0.0, %v1257
    %v1259 = vpop.f32.mrf.mxu0
    %1260 = vdwg.mxu0
    %1261 = vmatprep.subr.mxu0 0.0
    %v1262 = vand.u32 %v527, 4294901760
    %v1263 = vsub.f32 %v527, %v1262
    %v1264 = vand.u32 %v1263, 4294901760
    %v1265 = vsub.f32 %v1263, %v1264
    %v1266 = vand.u32 %v1265, 4294901760
    %1267 = vmatpush1.msra.mxu0 %v1266
    %1268 = vmatprep.subr.mxu0 0.0
    %v1269 = vand.u32 %v526, 4294901760
    %v1270 = vsub.f32 %v526, %v1269
    %v1271 = vand.u32 %v1270, 4294901760
    %v1272 = vsub.f32 %v1270, %v1271
    %v1273 = vand.u32 %v1272, 4294901760
    %1274 = vmatpush1.msra.mxu0 %v1273
    %1275 = vmatprep.subr.mxu0 0.0
    %v1276 = vand.u32 %v525, 4294901760
    %v1277 = vsub.f32 %v525, %v1276
    %v1278 = vand.u32 %v1277, 4294901760
    %v1279 = vsub.f32 %v1277, %v1278
    %v1280 = vand.u32 %v1279, 4294901760
    %1281 = vmatpush1.msra.mxu0 %v1280
    %1282 = vmatprep.subr.mxu0 0.0
    %v1283 = vand.u32 %v524, 4294901760
    %v1284 = vsub.f32 %v524, %v1283
    %v1285 = vand.u32 %v1284, 4294901760
    %v1286 = vsub.f32 %v1284, %v1285
    %v1287 = vand.u32 %v1286, 4294901760
    %1288 = vmatpush1.msra.mxu0 %v1287
    %1289 = vmatprep.subr.mxu0 0.0
    %v1290 = vand.u32 %v523, 4294901760
    %v1291 = vsub.f32 %v523, %v1290
    %v1292 = vand.u32 %v1291, 4294901760
    %v1293 = vsub.f32 %v1291, %v1292
    %v1294 = vand.u32 %v1293, 4294901760
    %1295 = vmatpush1.msra.mxu0 %v1294
    %1296 = vmatprep.subr.mxu0 0.0
    %v1297 = vand.u32 %v522, 4294901760
    %v1298 = vsub.f32 %v522, %v1297
    %v1299 = vand.u32 %v1298, 4294901760
    %v1300 = vsub.f32 %v1298, %v1299
    %v1301 = vand.u32 %v1300, 4294901760
    %1302 = vmatpush1.msra.mxu0 %v1301
    %1303 = vmatprep.subr.mxu0 0.0
    %v1304 = vand.u32 %v521, 4294901760
    %v1305 = vsub.f32 %v521, %v1304
    %v1306 = vand.u32 %v1305, 4294901760
    %v1307 = vsub.f32 %v1305, %v1306
    %v1308 = vand.u32 %v1307, 4294901760
    %1309 = vmatpush1.msra.mxu0 %v1308
    %1310 = vmatprep.subr.mxu0 0.0
    %v1311 = vand.u32 %v520, 4294901760
    %v1312 = vsub.f32 %v520, %v1311
    %v1313 = vand.u32 %v1312, 4294901760
    %v1314 = vsub.f32 %v1312, %v1313
    %v1315 = vand.u32 %v1314, 4294901760
    %1316 = vmatpush1.msra.mxu0 %v1315
    %1317 = vmatprep.subr.mxu0 0.0
    %v1318 = vand.u32 %v519, 4294901760
    %v1319 = vsub.f32 %v519, %v1318
    %v1320 = vand.u32 %v1319, 4294901760
    %v1321 = vsub.f32 %v1319, %v1320
    %v1322 = vand.u32 %v1321, 4294901760
    %1323 = vmatpush1.msra.mxu0 %v1322
    %1324 = vmatprep.subr.mxu0 0.0
    %v1325 = vand.u32 %v518, 4294901760
    %v1326 = vsub.f32 %v518, %v1325
    %v1327 = vand.u32 %v1326, 4294901760
    %v1328 = vsub.f32 %v1326, %v1327
    %v1329 = vand.u32 %v1328, 4294901760
    %1330 = vmatpush1.msra.mxu0 %v1329
    %1331 = vmatprep.subr.mxu0 0.0
    %v1332 = vand.u32 %v517, 4294901760
    %v1333 = vsub.f32 %v517, %v1332
    %v1334 = vand.u32 %v1333, 4294901760
    %v1335 = vsub.f32 %v1333, %v1334
    %v1336 = vand.u32 %v1335, 4294901760
    %1337 = vmatpush1.msra.mxu0 %v1336
    %1338 = vmatprep.subr.mxu0 0.0
    %v1339 = vand.u32 %v516, 4294901760
    %v1340 = vsub.f32 %v516, %v1339
    %v1341 = vand.u32 %v1340, 4294901760
    %v1342 = vsub.f32 %v1340, %v1341
    %v1343 = vand.u32 %v1342, 4294901760
    %1344 = vmatpush1.msra.mxu0 %v1343
    %1345 = vmatprep.subr.mxu0 0.0
    %v1346 = vand.u32 %v515, 4294901760
    %v1347 = vsub.f32 %v515, %v1346
    %v1348 = vand.u32 %v1347, 4294901760
    %v1349 = vsub.f32 %v1347, %v1348
    %v1350 = vand.u32 %v1349, 4294901760
    %1351 = vmatpush1.msra.mxu0 %v1350
    %1352 = vmatprep.subr.mxu0 0.0
    %v1353 = vand.u32 %v514, 4294901760
    %v1354 = vsub.f32 %v514, %v1353
    %v1355 = vand.u32 %v1354, 4294901760
    %v1356 = vsub.f32 %v1354, %v1355
    %v1357 = vand.u32 %v1356, 4294901760
    %1358 = vmatpush1.msra.mxu0 %v1357
    %1359 = vmatprep.subr.mxu0 0.0
    %v1360 = vand.u32 %v513, 4294901760
    %v1361 = vsub.f32 %v513, %v1360
    %v1362 = vand.u32 %v1361, 4294901760
    %v1363 = vsub.f32 %v1361, %v1362
    %v1364 = vand.u32 %v1363, 4294901760
    %1365 = vmatpush1.msra.mxu0 %v1364
    %1366 = vmatprep.subr.mxu0 0.0
    %v1367 = vand.u32 %v512, 4294901760
    %v1368 = vsub.f32 %v512, %v1367
    %v1369 = vand.u32 %v1368, 4294901760
    %v1370 = vsub.f32 %v1368, %v1369
    %v1371 = vand.u32 %v1370, 4294901760
    %1372 = vmatpush1.msra.mxu0 %v1371
    %1373 = vmatprep.subr.mxu0 0.0
    %1374 = vmatpush2.msra.mxu0 0.0
    %1375 = vmatprep.subr.mxu0 0.0
    %1376 = vmatpush2.msra.mxu0 0.0
    %1377 = vmatprep.subr.mxu0 0.0
    %1378 = vmatpush2.msra.mxu0 0.0
    %1379 = vmatprep.subr.mxu0 0.0
    %1380 = vmatpush2.msra.mxu0 0.0
    %1381 = vmatprep.subr.mxu0 0.0
    %1382 = vmatpush2.msra.mxu0 0.0
    %1383 = vmatprep.subr.mxu0 0.0
    %1384 = vmatpush2.msra.mxu0 0.0
    %1385 = vmatprep.subr.mxu0 0.0
    %1386 = vmatpush2.msra.mxu0 0.0
    %1387 = vmatprep.subr.mxu0 0.0
    %1388 = vmatpush2.msra.mxu0 0.0
    %1389 = vmatprep.subr.mxu0 0.0
    %1390 = vmatpush2.msra.mxu0 0.0
    %1391 = vmatprep.subr.mxu0 0.0
    %1392 = vmatpush2.msra.mxu0 0.0
    %1393 = vmatprep.subr.mxu0 0.0
    %1394 = vmatpush2.msra.mxu0 0.0
    %1395 = vmatprep.subr.mxu0 0.0
    %1396 = vmatpush2.msra.mxu0 0.0
    %1397 = vmatprep.subr.mxu0 0.0
    %1398 = vmatpush2.msra.mxu0 0.0
    %1399 = vmatprep.subr.mxu0 0.0
    %1400 = vmatpush2.msra.mxu0 0.0
    %1401 = vmatprep.subr.mxu0 0.0
    %1402 = vmatpush2.msra.mxu0 0.0
    %1403 = vmatprep.subr.mxu0 0.0
    %1404 = vmatpush2.msra.mxu0 0.0
    %1405 = vmatprep.mubr.f32.mxu0 0.0
    %v1406 = vand.u32 %v1169, 4294901760
    %1407 = vmatmul.mubr.f32.gmra.mxu0 %v1406
    %v1408 = vpop.f32.mrf.mxu0
    %v1409 = vadd.f32 %v1258, %v1408
    %v1410 = vpop.f32.mrf.mxu0
    %1411 = vdwg.mxu0
    %1412 = vmatprep.subr.mxu0 0.0
    %v1413 = vand.u32 %v527, 4294901760
    %v1414 = vsub.f32 %v527, %v1413
    %1415 = vmatpush1.msra.mxu0 %v1414
    %1416 = vmatprep.subr.mxu0 0.0
    %v1417 = vand.u32 %v526, 4294901760
    %v1418 = vsub.f32 %v526, %v1417
    %1419 = vmatpush1.msra.mxu0 %v1418
    %1420 = vmatprep.subr.mxu0 0.0
    %v1421 = vand.u32 %v525, 4294901760
    %v1422 = vsub.f32 %v525, %v1421
    %1423 = vmatpush1.msra.mxu0 %v1422
    %1424 = vmatprep.subr.mxu0 0.0
    %v1425 = vand.u32 %v524, 4294901760
    %v1426 = vsub.f32 %v524, %v1425
    %1427 = vmatpush1.msra.mxu0 %v1426
    %1428 = vmatprep.subr.mxu0 0.0
    %v1429 = vand.u32 %v523, 4294901760
    %v1430 = vsub.f32 %v523, %v1429
    %1431 = vmatpush1.msra.mxu0 %v1430
    %1432 = vmatprep.subr.mxu0 0.0
    %v1433 = vand.u32 %v522, 4294901760
    %v1434 = vsub.f32 %v522, %v1433
    %1435 = vmatpush1.msra.mxu0 %v1434
    %1436 = vmatprep.subr.mxu0 0.0
    %v1437 = vand.u32 %v521, 4294901760
    %v1438 = vsub.f32 %v521, %v1437
    %1439 = vmatpush1.msra.mxu0 %v1438
    %1440 = vmatprep.subr.mxu0 0.0
    %v1441 = vand.u32 %v520, 4294901760
    %v1442 = vsub.f32 %v520, %v1441
    %1443 = vmatpush1.msra.mxu0 %v1442
    %1444 = vmatprep.subr.mxu0 0.0
    %v1445 = vand.u32 %v519, 4294901760
    %v1446 = vsub.f32 %v519, %v1445
    %1447 = vmatpush1.msra.mxu0 %v1446
    %1448 = vmatprep.subr.mxu0 0.0
    %v1449 = vand.u32 %v518, 4294901760
    %v1450 = vsub.f32 %v518, %v1449
    %1451 = vmatpush1.msra.mxu0 %v1450
    %1452 = vmatprep.subr.mxu0 0.0
    %v1453 = vand.u32 %v517, 4294901760
    %v1454 = vsub.f32 %v517, %v1453
    %1455 = vmatpush1.msra.mxu0 %v1454
    %1456 = vmatprep.subr.mxu0 0.0
    %v1457 = vand.u32 %v516, 4294901760
    %v1458 = vsub.f32 %v516, %v1457
    %1459 = vmatpush1.msra.mxu0 %v1458
    %1460 = vmatprep.subr.mxu0 0.0
    %v1461 = vand.u32 %v515, 4294901760
    %v1462 = vsub.f32 %v515, %v1461
    %1463 = vmatpush1.msra.mxu0 %v1462
    %1464 = vmatprep.subr.mxu0 0.0
    %v1465 = vand.u32 %v514, 4294901760
    %v1466 = vsub.f32 %v514, %v1465
    %1467 = vmatpush1.msra.mxu0 %v1466
    %1468 = vmatprep.subr.mxu0 0.0
    %v1469 = vand.u32 %v513, 4294901760
    %v1470 = vsub.f32 %v513, %v1469
    %1471 = vmatpush1.msra.mxu0 %v1470
    %1472 = vmatprep.subr.mxu0 0.0
    %v1473 = vand.u32 %v512, 4294901760
    %v1474 = vsub.f32 %v512, %v1473
    %1475 = vmatpush1.msra.mxu0 %v1474
    %1476 = vmatprep.subr.mxu0 0.0
    %1477 = vmatpush2.msra.mxu0 0.0
    %1478 = vmatprep.subr.mxu0 0.0
    %1479 = vmatpush2.msra.mxu0 0.0
    %1480 = vmatprep.subr.mxu0 0.0
    %1481 = vmatpush2.msra.mxu0 0.0
    %1482 = vmatprep.subr.mxu0 0.0
    %1483 = vmatpush2.msra.mxu0 0.0
    %1484 = vmatprep.subr.mxu0 0.0
    %1485 = vmatpush2.msra.mxu0 0.0
    %1486 = vmatprep.subr.mxu0 0.0
    %1487 = vmatpush2.msra.mxu0 0.0
    %1488 = vmatprep.subr.mxu0 0.0
    %1489 = vmatpush2.msra.mxu0 0.0
    %1490 = vmatprep.subr.mxu0 0.0
    %1491 = vmatpush2.msra.mxu0 0.0
    %1492 = vmatprep.subr.mxu0 0.0
    %1493 = vmatpush2.msra.mxu0 0.0
    %1494 = vmatprep.subr.mxu0 0.0
    %1495 = vmatpush2.msra.mxu0 0.0
    %1496 = vmatprep.subr.mxu0 0.0
    %1497 = vmatpush2.msra.mxu0 0.0
    %1498 = vmatprep.subr.mxu0 0.0
    %1499 = vmatpush2.msra.mxu0 0.0
    %1500 = vmatprep.subr.mxu0 0.0
    %1501 = vmatpush2.msra.mxu0 0.0
    %1502 = vmatprep.subr.mxu0 0.0
    %1503 = vmatpush2.msra.mxu0 0.0
    %1504 = vmatprep.subr.mxu0 0.0
    %1505 = vmatpush2.msra.mxu0 0.0
    %1506 = vmatprep.subr.mxu0 0.0
    %1507 = vmatpush2.msra.mxu0 0.0
    %1508 = vmatprep.mubr.f32.mxu0 0.0
    %v1509 = vand.u32 %v1169, 4294901760
    %v1510 = vsub.f32 %v1169, %v1509
    %1511 = vmatmul.mubr.f32.gmra.mxu0 %v1510
    %v1512 = vpop.f32.mrf.mxu0
    %v1513 = vadd.f32 %v1409, %v1512
    %v1514 = vpop.f32.mrf.mxu0
    %1515 = vdwg.mxu0
    %1516 = vmatprep.subr.mxu0 0.0
    %v1517 = vand.u32 %v527, 4294901760
    %1518 = vmatpush1.msra.mxu0 %v1517
    %1519 = vmatprep.subr.mxu0 0.0
    %v1520 = vand.u32 %v526, 4294901760
    %1521 = vmatpush1.msra.mxu0 %v1520
    %1522 = vmatprep.subr.mxu0 0.0
    %v1523 = vand.u32 %v525, 4294901760
    %1524 = vmatpush1.msra.mxu0 %v1523
    %1525 = vmatprep.subr.mxu0 0.0
    %v1526 = vand.u32 %v524, 4294901760
    %1527 = vmatpush1.msra.mxu0 %v1526
    %1528 = vmatprep.subr.mxu0 0.0
    %v1529 = vand.u32 %v523, 4294901760
    %1530 = vmatpush1.msra.mxu0 %v1529
    %1531 = vmatprep.subr.mxu0 0.0
    %v1532 = vand.u32 %v522, 4294901760
    %1533 = vmatpush1.msra.mxu0 %v1532
    %1534 = vmatprep.subr.mxu0 0.0
    %v1535 = vand.u32 %v521, 4294901760
    %1536 = vmatpush1.msra.mxu0 %v1535
    %1537 = vmatprep.subr.mxu0 0.0
    %v1538 = vand.u32 %v520, 4294901760
    %1539 = vmatpush1.msra.mxu0 %v1538
    %1540 = vmatprep.subr.mxu0 0.0
    %v1541 = vand.u32 %v519, 4294901760
    %1542 = vmatpush1.msra.mxu0 %v1541
    %1543 = vmatprep.subr.mxu0 0.0
    %v1544 = vand.u32 %v518, 4294901760
    %1545 = vmatpush1.msra.mxu0 %v1544
    %1546 = vmatprep.subr.mxu0 0.0
    %v1547 = vand.u32 %v517, 4294901760
    %1548 = vmatpush1.msra.mxu0 %v1547
    %1549 = vmatprep.subr.mxu0 0.0
    %v1550 = vand.u32 %v516, 4294901760
    %1551 = vmatpush1.msra.mxu0 %v1550
    %1552 = vmatprep.subr.mxu0 0.0
    %v1553 = vand.u32 %v515, 4294901760
    %1554 = vmatpush1.msra.mxu0 %v1553
    %1555 = vmatprep.subr.mxu0 0.0
    %v1556 = vand.u32 %v514, 4294901760
    %1557 = vmatpush1.msra.mxu0 %v1556
    %1558 = vmatprep.subr.mxu0 0.0
    %v1559 = vand.u32 %v513, 4294901760
    %1560 = vmatpush1.msra.mxu0 %v1559
    %1561 = vmatprep.subr.mxu0 0.0
    %v1562 = vand.u32 %v512, 4294901760
    %1563 = vmatpush1.msra.mxu0 %v1562
    %1564 = vmatprep.subr.mxu0 0.0
    %1565 = vmatpush2.msra.mxu0 0.0
    %1566 = vmatprep.subr.mxu0 0.0
    %1567 = vmatpush2.msra.mxu0 0.0
    %1568 = vmatprep.subr.mxu0 0.0
    %1569 = vmatpush2.msra.mxu0 0.0
    %1570 = vmatprep.subr.mxu0 0.0
    %1571 = vmatpush2.msra.mxu0 0.0
    %1572 = vmatprep.subr.mxu0 0.0
    %1573 = vmatpush2.msra.mxu0 0.0
    %1574 = vmatprep.subr.mxu0 0.0
    %1575 = vmatpush2.msra.mxu0 0.0
    %1576 = vmatprep.subr.mxu0 0.0
    %1577 = vmatpush2.msra.mxu0 0.0
    %1578 = vmatprep.subr.mxu0 0.0
    %1579 = vmatpush2.msra.mxu0 0.0
    %1580 = vmatprep.subr.mxu0 0.0
    %1581 = vmatpush2.msra.mxu0 0.0
    %1582 = vmatprep.subr.mxu0 0.0
    %1583 = vmatpush2.msra.mxu0 0.0
    %1584 = vmatprep.subr.mxu0 0.0
    %1585 = vmatpush2.msra.mxu0 0.0
    %1586 = vmatprep.subr.mxu0 0.0
    %1587 = vmatpush2.msra.mxu0 0.0
    %1588 = vmatprep.subr.mxu0 0.0
    %1589 = vmatpush2.msra.mxu0 0.0
    %1590 = vmatprep.subr.mxu0 0.0
    %1591 = vmatpush2.msra.mxu0 0.0
    %1592 = vmatprep.subr.mxu0 0.0
    %1593 = vmatpush2.msra.mxu0 0.0
    %1594 = vmatprep.subr.mxu0 0.0
    %1595 = vmatpush2.msra.mxu0 0.0
    %1596 = vmatprep.mubr.f32.mxu0 0.0
    %v1597 = vand.u32 %v1169, 4294901760
    %v1598 = vsub.f32 %v1169, %v1597
    %v1599 = vand.u32 %v1598, 4294901760
    %1600 = vmatmul.mubr.f32.gmra.mxu0 %v1599
    %v1601 = vpop.f32.mrf.mxu0
    %v1602 = vadd.f32 %v1513, %v1601
    %v1603 = vpop.f32.mrf.mxu0
    %1604 = vdwg.mxu0
    %1605 = vmatprep.subr.mxu0 0.0
    %v1606 = vand.u32 %v527, 4294901760
    %v1607 = vsub.f32 %v527, %v1606
    %v1608 = vand.u32 %v1607, 4294901760
    %1609 = vmatpush1.msra.mxu0 %v1608
    %1610 = vmatprep.subr.mxu0 0.0
    %v1611 = vand.u32 %v526, 4294901760
    %v1612 = vsub.f32 %v526, %v1611
    %v1613 = vand.u32 %v1612, 4294901760
    %1614 = vmatpush1.msra.mxu0 %v1613
    %1615 = vmatprep.subr.mxu0 0.0
    %v1616 = vand.u32 %v525, 4294901760
    %v1617 = vsub.f32 %v525, %v1616
    %v1618 = vand.u32 %v1617, 4294901760
    %1619 = vmatpush1.msra.mxu0 %v1618
    %1620 = vmatprep.subr.mxu0 0.0
    %v1621 = vand.u32 %v524, 4294901760
    %v1622 = vsub.f32 %v524, %v1621
    %v1623 = vand.u32 %v1622, 4294901760
    %1624 = vmatpush1.msra.mxu0 %v1623
    %1625 = vmatprep.subr.mxu0 0.0
    %v1626 = vand.u32 %v523, 4294901760
    %v1627 = vsub.f32 %v523, %v1626
    %v1628 = vand.u32 %v1627, 4294901760
    %1629 = vmatpush1.msra.mxu0 %v1628
    %1630 = vmatprep.subr.mxu0 0.0
    %v1631 = vand.u32 %v522, 4294901760
    %v1632 = vsub.f32 %v522, %v1631
    %v1633 = vand.u32 %v1632, 4294901760
    %1634 = vmatpush1.msra.mxu0 %v1633
    %1635 = vmatprep.subr.mxu0 0.0
    %v1636 = vand.u32 %v521, 4294901760
    %v1637 = vsub.f32 %v521, %v1636
    %v1638 = vand.u32 %v1637, 4294901760
    %1639 = vmatpush1.msra.mxu0 %v1638
    %1640 = vmatprep.subr.mxu0 0.0
    %v1641 = vand.u32 %v520, 4294901760
    %v1642 = vsub.f32 %v520, %v1641
    %v1643 = vand.u32 %v1642, 4294901760
    %1644 = vmatpush1.msra.mxu0 %v1643
    %1645 = vmatprep.subr.mxu0 0.0
    %v1646 = vand.u32 %v519, 4294901760
    %v1647 = vsub.f32 %v519, %v1646
    %v1648 = vand.u32 %v1647, 4294901760
    %1649 = vmatpush1.msra.mxu0 %v1648
    %1650 = vmatprep.subr.mxu0 0.0
    %v1651 = vand.u32 %v518, 4294901760
    %v1652 = vsub.f32 %v518, %v1651
    %v1653 = vand.u32 %v1652, 4294901760
    %1654 = vmatpush1.msra.mxu0 %v1653
    %1655 = vmatprep.subr.mxu0 0.0
    %v1656 = vand.u32 %v517, 4294901760
    %v1657 = vsub.f32 %v517, %v1656
    %v1658 = vand.u32 %v1657, 4294901760
    %1659 = vmatpush1.msra.mxu0 %v1658
    %1660 = vmatprep.subr.mxu0 0.0
    %v1661 = vand.u32 %v516, 4294901760
    %v1662 = vsub.f32 %v516, %v1661
    %v1663 = vand.u32 %v1662, 4294901760
    %1664 = vmatpush1.msra.mxu0 %v1663
    %1665 = vmatprep.subr.mxu0 0.0
    %v1666 = vand.u32 %v515, 4294901760
    %v1667 = vsub.f32 %v515, %v1666
    %v1668 = vand.u32 %v1667, 4294901760
    %1669 = vmatpush1.msra.mxu0 %v1668
    %1670 = vmatprep.subr.mxu0 0.0
    %v1671 = vand.u32 %v514, 4294901760
    %v1672 = vsub.f32 %v514, %v1671
    %v1673 = vand.u32 %v1672, 4294901760
    %1674 = vmatpush1.msra.mxu0 %v1673
    %1675 = vmatprep.subr.mxu0 0.0
    %v1676 = vand.u32 %v513, 4294901760
    %v1677 = vsub.f32 %v513, %v1676
    %v1678 = vand.u32 %v1677, 4294901760
    %1679 = vmatpush1.msra.mxu0 %v1678
    %1680 = vmatprep.subr.mxu0 0.0
    %v1681 = vand.u32 %v512, 4294901760
    %v1682 = vsub.f32 %v512, %v1681
    %v1683 = vand.u32 %v1682, 4294901760
    %1684 = vmatpush1.msra.mxu0 %v1683
    %1685 = vmatprep.subr.mxu0 0.0
    %1686 = vmatpush2.msra.mxu0 0.0
    %1687 = vmatprep.subr.mxu0 0.0
    %1688 = vmatpush2.msra.mxu0 0.0
    %1689 = vmatprep.subr.mxu0 0.0
    %1690 = vmatpush2.msra.mxu0 0.0
    %1691 = vmatprep.subr.mxu0 0.0
    %1692 = vmatpush2.msra.mxu0 0.0
    %1693 = vmatprep.subr.mxu0 0.0
    %1694 = vmatpush2.msra.mxu0 0.0
    %1695 = vmatprep.subr.mxu0 0.0
    %1696 = vmatpush2.msra.mxu0 0.0
    %1697 = vmatprep.subr.mxu0 0.0
    %1698 = vmatpush2.msra.mxu0 0.0
    %1699 = vmatprep.subr.mxu0 0.0
    %1700 = vmatpush2.msra.mxu0 0.0
    %1701 = vmatprep.subr.mxu0 0.0
    %1702 = vmatpush2.msra.mxu0 0.0
    %1703 = vmatprep.subr.mxu0 0.0
    %1704 = vmatpush2.msra.mxu0 0.0
    %1705 = vmatprep.subr.mxu0 0.0
    %1706 = vmatpush2.msra.mxu0 0.0
    %1707 = vmatprep.subr.mxu0 0.0
    %1708 = vmatpush2.msra.mxu0 0.0
    %1709 = vmatprep.subr.mxu0 0.0
    %1710 = vmatpush2.msra.mxu0 0.0
    %1711 = vmatprep.subr.mxu0 0.0
    %1712 = vmatpush2.msra.mxu0 0.0
    %1713 = vmatprep.subr.mxu0 0.0
    %1714 = vmatpush2.msra.mxu0 0.0
    %1715 = vmatprep.subr.mxu0 0.0
    %1716 = vmatpush2.msra.mxu0 0.0
    %1717 = vmatprep.mubr.f32.mxu0 0.0
    %v1718 = vand.u32 %v1169, 4294901760
    %1719 = vmatmul.mubr.f32.gmra.mxu0 %v1718
    %v1720 = vpop.f32.mrf.mxu0
    %v1721 = vadd.f32 %v1602, %v1720
    %v1722 = vpop.f32.mrf.mxu0
    %1723 = vdwg.mxu0
    %1724 = vmatprep.subr.mxu0 0.0
    %v1725 = vand.u32 %v527, 4294901760
    %1726 = vmatpush1.msra.mxu0 %v1725
    %1727 = vmatprep.subr.mxu0 0.0
    %v1728 = vand.u32 %v526, 4294901760
    %1729 = vmatpush1.msra.mxu0 %v1728
    %1730 = vmatprep.subr.mxu0 0.0
    %v1731 = vand.u32 %v525, 4294901760
    %1732 = vmatpush1.msra.mxu0 %v1731
    %1733 = vmatprep.subr.mxu0 0.0
    %v1734 = vand.u32 %v524, 4294901760
    %1735 = vmatpush1.msra.mxu0 %v1734
    %1736 = vmatprep.subr.mxu0 0.0
    %v1737 = vand.u32 %v523, 4294901760
    %1738 = vmatpush1.msra.mxu0 %v1737
    %1739 = vmatprep.subr.mxu0 0.0
    %v1740 = vand.u32 %v522, 4294901760
    %1741 = vmatpush1.msra.mxu0 %v1740
    %1742 = vmatprep.subr.mxu0 0.0
    %v1743 = vand.u32 %v521, 4294901760
    %1744 = vmatpush1.msra.mxu0 %v1743
    %1745 = vmatprep.subr.mxu0 0.0
    %v1746 = vand.u32 %v520, 4294901760
    %1747 = vmatpush1.msra.mxu0 %v1746
    %1748 = vmatprep.subr.mxu0 0.0
    %v1749 = vand.u32 %v519, 4294901760
    %1750 = vmatpush1.msra.mxu0 %v1749
    %1751 = vmatprep.subr.mxu0 0.0
    %v1752 = vand.u32 %v518, 4294901760
    %1753 = vmatpush1.msra.mxu0 %v1752
    %1754 = vmatprep.subr.mxu0 0.0
    %v1755 = vand.u32 %v517, 4294901760
    %1756 = vmatpush1.msra.mxu0 %v1755
    %1757 = vmatprep.subr.mxu0 0.0
    %v1758 = vand.u32 %v516, 4294901760
    %1759 = vmatpush1.msra.mxu0 %v1758
    %1760 = vmatprep.subr.mxu0 0.0
    %v1761 = vand.u32 %v515, 4294901760
    %1762 = vmatpush1.msra.mxu0 %v1761
    %1763 = vmatprep.subr.mxu0 0.0
    %v1764 = vand.u32 %v514, 4294901760
    %1765 = vmatpush1.msra.mxu0 %v1764
    %1766 = vmatprep.subr.mxu0 0.0
    %v1767 = vand.u32 %v513, 4294901760
    %1768 = vmatpush1.msra.mxu0 %v1767
    %1769 = vmatprep.subr.mxu0 0.0
    %v1770 = vand.u32 %v512, 4294901760
    %1771 = vmatpush1.msra.mxu0 %v1770
    %1772 = vmatprep.subr.mxu0 0.0
    %1773 = vmatpush2.msra.mxu0 0.0
    %1774 = vmatprep.subr.mxu0 0.0
    %1775 = vmatpush2.msra.mxu0 0.0
    %1776 = vmatprep.subr.mxu0 0.0
    %1777 = vmatpush2.msra.mxu0 0.0
    %1778 = vmatprep.subr.mxu0 0.0
    %1779 = vmatpush2.msra.mxu0 0.0
    %1780 = vmatprep.subr.mxu0 0.0
    %1781 = vmatpush2.msra.mxu0 0.0
    %1782 = vmatprep.subr.mxu0 0.0
    %1783 = vmatpush2.msra.mxu0 0.0
    %1784 = vmatprep.subr.mxu0 0.0
    %1785 = vmatpush2.msra.mxu0 0.0
    %1786 = vmatprep.subr.mxu0 0.0
    %1787 = vmatpush2.msra.mxu0 0.0
    %1788 = vmatprep.subr.mxu0 0.0
    %1789 = vmatpush2.msra.mxu0 0.0
    %1790 = vmatprep.subr.mxu0 0.0
    %1791 = vmatpush2.msra.mxu0 0.0
    %1792 = vmatprep.subr.mxu0 0.0
    %1793 = vmatpush2.msra.mxu0 0.0
    %1794 = vmatprep.subr.mxu0 0.0
    %1795 = vmatpush2.msra.mxu0 0.0
    %1796 = vmatprep.subr.mxu0 0.0
    %1797 = vmatpush2.msra.mxu0 0.0
    %1798 = vmatprep.subr.mxu0 0.0
    %1799 = vmatpush2.msra.mxu0 0.0
    %1800 = vmatprep.subr.mxu0 0.0
    %1801 = vmatpush2.msra.mxu0 0.0
    %1802 = vmatprep.subr.mxu0 0.0
    %1803 = vmatpush2.msra.mxu0 0.0
    %1804 = vmatprep.mubr.f32.mxu0 0.0
    %v1805 = vand.u32 %v1169, 4294901760
    %1806 = vmatmul.mubr.f32.gmra.mxu0 %v1805
    %v1807 = vpop.f32.mrf.mxu0
    %v1808 = vadd.f32 %v1721, %v1807
    %v1809 = vpop.f32.mrf.mxu0
    %1810 = vdwg.mxu0
    %v1811 = vcvt.s32.f32 %v391
    %v1812 = vmul.f32 %v1811, %v506
    %1813 = vmatprep.subr.mxu0 0.0
    %v1814 = vand.u32 %v527, 4294901760
    %1815 = vmatpush1.msra.mxu0 %v1814
    %1816 = vmatprep.subr.mxu0 0.0
    %v1817 = vand.u32 %v526, 4294901760
    %1818 = vmatpush1.msra.mxu0 %v1817
    %1819 = vmatprep.subr.mxu0 0.0
    %v1820 = vand.u32 %v525, 4294901760
    %1821 = vmatpush1.msra.mxu0 %v1820
    %1822 = vmatprep.subr.mxu0 0.0
    %v1823 = vand.u32 %v524, 4294901760
    %1824 = vmatpush1.msra.mxu0 %v1823
    %1825 = vmatprep.subr.mxu0 0.0
    %v1826 = vand.u32 %v523, 4294901760
    %1827 = vmatpush1.msra.mxu0 %v1826
    %1828 = vmatprep.subr.mxu0 0.0
    %v1829 = vand.u32 %v522, 4294901760
    %1830 = vmatpush1.msra.mxu0 %v1829
    %1831 = vmatprep.subr.mxu0 0.0
    %v1832 = vand.u32 %v521, 4294901760
    %1833 = vmatpush1.msra.mxu0 %v1832
    %1834 = vmatprep.subr.mxu0 0.0
    %v1835 = vand.u32 %v520, 4294901760
    %1836 = vmatpush1.msra.mxu0 %v1835
    %1837 = vmatprep.subr.mxu0 0.0
    %v1838 = vand.u32 %v519, 4294901760
    %1839 = vmatpush1.msra.mxu0 %v1838
    %1840 = vmatprep.subr.mxu0 0.0
    %v1841 = vand.u32 %v518, 4294901760
    %1842 = vmatpush1.msra.mxu0 %v1841
    %1843 = vmatprep.subr.mxu0 0.0
    %v1844 = vand.u32 %v517, 4294901760
    %1845 = vmatpush1.msra.mxu0 %v1844
    %1846 = vmatprep.subr.mxu0 0.0
    %v1847 = vand.u32 %v516, 4294901760
    %1848 = vmatpush1.msra.mxu0 %v1847
    %1849 = vmatprep.subr.mxu0 0.0
    %v1850 = vand.u32 %v515, 4294901760
    %1851 = vmatpush1.msra.mxu0 %v1850
    %1852 = vmatprep.subr.mxu0 0.0
    %v1853 = vand.u32 %v514, 4294901760
    %1854 = vmatpush1.msra.mxu0 %v1853
    %1855 = vmatprep.subr.mxu0 0.0
    %v1856 = vand.u32 %v513, 4294901760
    %1857 = vmatpush1.msra.mxu0 %v1856
    %1858 = vmatprep.subr.mxu0 0.0
    %v1859 = vand.u32 %v512, 4294901760
    %1860 = vmatpush1.msra.mxu0 %v1859
    %1861 = vmatprep.subr.mxu0 0.0
    %1862 = vmatpush2.msra.mxu0 0.0
    %1863 = vmatprep.subr.mxu0 0.0
    %1864 = vmatpush2.msra.mxu0 0.0
    %1865 = vmatprep.subr.mxu0 0.0
    %1866 = vmatpush2.msra.mxu0 0.0
    %1867 = vmatprep.subr.mxu0 0.0
    %1868 = vmatpush2.msra.mxu0 0.0
    %1869 = vmatprep.subr.mxu0 0.0
    %1870 = vmatpush2.msra.mxu0 0.0
    %1871 = vmatprep.subr.mxu0 0.0
    %1872 = vmatpush2.msra.mxu0 0.0
    %1873 = vmatprep.subr.mxu0 0.0
    %1874 = vmatpush2.msra.mxu0 0.0
    %1875 = vmatprep.subr.mxu0 0.0
    %1876 = vmatpush2.msra.mxu0 0.0
    %1877 = vmatprep.subr.mxu0 0.0
    %1878 = vmatpush2.msra.mxu0 0.0
    %1879 = vmatprep.subr.mxu0 0.0
    %1880 = vmatpush2.msra.mxu0 0.0
    %1881 = vmatprep.subr.mxu0 0.0
    %1882 = vmatpush2.msra.mxu0 0.0
    %1883 = vmatprep.subr.mxu0 0.0
    %1884 = vmatpush2.msra.mxu0 0.0
    %1885 = vmatprep.subr.mxu0 0.0
    %1886 = vmatpush2.msra.mxu0 0.0
    %1887 = vmatprep.subr.mxu0 0.0
    %1888 = vmatpush2.msra.mxu0 0.0
    %1889 = vmatprep.subr.mxu0 0.0
    %1890 = vmatpush2.msra.mxu0 0.0
    %1891 = vmatprep.subr.mxu0 0.0
    %1892 = vmatpush2.msra.mxu0 0.0
    %1893 = vmatprep.mubr.f32.mxu0 0.0
    %v1894 = vand.u32 %v1812, 4294901760
    %v1895 = vsub.f32 %v1812, %v1894
    %v1896 = vand.u32 %v1895, 4294901760
    %v1897 = vsub.f32 %v1895, %v1896
    %v1898 = vand.u32 %v1897, 4294901760
    %1899 = vmatmul.mubr.f32.gmra.mxu0 %v1898
    %v1900 = vpop.f32.mrf.mxu0
    %v1901 = vadd.f32 0.0, %v1900
    %v1902 = vpop.f32.mrf.mxu0
    %1903 = vdwg.mxu0
    %1904 = vmatprep.subr.mxu0 0.0
    %v1905 = vand.u32 %v527, 4294901760
    %v1906 = vsub.f32 %v527, %v1905
    %v1907 = vand.u32 %v1906, 4294901760
    %v1908 = vsub.f32 %v1906, %v1907
    %v1909 = vand.u32 %v1908, 4294901760
    %1910 = vmatpush1.msra.mxu0 %v1909
    %1911 = vmatprep.subr.mxu0 0.0
    %v1912 = vand.u32 %v526, 4294901760
    %v1913 = vsub.f32 %v526, %v1912
    %v1914 = vand.u32 %v1913, 4294901760
    %v1915 = vsub.f32 %v1913, %v1914
    %v1916 = vand.u32 %v1915, 4294901760
    %1917 = vmatpush1.msra.mxu0 %v1916
    %1918 = vmatprep.subr.mxu0 0.0
    %v1919 = vand.u32 %v525, 4294901760
    %v1920 = vsub.f32 %v525, %v1919
    %v1921 = vand.u32 %v1920, 4294901760
    %v1922 = vsub.f32 %v1920, %v1921
    %v1923 = vand.u32 %v1922, 4294901760
    %1924 = vmatpush1.msra.mxu0 %v1923
    %1925 = vmatprep.subr.mxu0 0.0
    %v1926 = vand.u32 %v524, 4294901760
    %v1927 = vsub.f32 %v524, %v1926
    %v1928 = vand.u32 %v1927, 4294901760
    %v1929 = vsub.f32 %v1927, %v1928
    %v1930 = vand.u32 %v1929, 4294901760
    %1931 = vmatpush1.msra.mxu0 %v1930
    %1932 = vmatprep.subr.mxu0 0.0
    %v1933 = vand.u32 %v523, 4294901760
    %v1934 = vsub.f32 %v523, %v1933
    %v1935 = vand.u32 %v1934, 4294901760
    %v1936 = vsub.f32 %v1934, %v1935
    %v1937 = vand.u32 %v1936, 4294901760
    %1938 = vmatpush1.msra.mxu0 %v1937
    %1939 = vmatprep.subr.mxu0 0.0
    %v1940 = vand.u32 %v522, 4294901760
    %v1941 = vsub.f32 %v522, %v1940
    %v1942 = vand.u32 %v1941, 4294901760
    %v1943 = vsub.f32 %v1941, %v1942
    %v1944 = vand.u32 %v1943, 4294901760
    %1945 = vmatpush1.msra.mxu0 %v1944
    %1946 = vmatprep.subr.mxu0 0.0
    %v1947 = vand.u32 %v521, 4294901760
    %v1948 = vsub.f32 %v521, %v1947
    %v1949 = vand.u32 %v1948, 4294901760
    %v1950 = vsub.f32 %v1948, %v1949
    %v1951 = vand.u32 %v1950, 4294901760
    %1952 = vmatpush1.msra.mxu0 %v1951
    %1953 = vmatprep.subr.mxu0 0.0
    %v1954 = vand.u32 %v520, 4294901760
    %v1955 = vsub.f32 %v520, %v1954
    %v1956 = vand.u32 %v1955, 4294901760
    %v1957 = vsub.f32 %v1955, %v1956
    %v1958 = vand.u32 %v1957, 4294901760
    %1959 = vmatpush1.msra.mxu0 %v1958
    %1960 = vmatprep.subr.mxu0 0.0
    %v1961 = vand.u32 %v519, 4294901760
    %v1962 = vsub.f32 %v519, %v1961
    %v1963 = vand.u32 %v1962, 4294901760
    %v1964 = vsub.f32 %v1962, %v1963
    %v1965 = vand.u32 %v1964, 4294901760
    %1966 = vmatpush1.msra.mxu0 %v1965
    %1967 = vmatprep.subr.mxu0 0.0
    %v1968 = vand.u32 %v518, 4294901760
    %v1969 = vsub.f32 %v518, %v1968
    %v1970 = vand.u32 %v1969, 4294901760
    %v1971 = vsub.f32 %v1969, %v1970
    %v1972 = vand.u32 %v1971, 4294901760
    %1973 = vmatpush1.msra.mxu0 %v1972
    %1974 = vmatprep.subr.mxu0 0.0
    %v1975 = vand.u32 %v517, 4294901760
    %v1976 = vsub.f32 %v517, %v1975
    %v1977 = vand.u32 %v1976, 4294901760
    %v1978 = vsub.f32 %v1976, %v1977
    %v1979 = vand.u32 %v1978, 4294901760
    %1980 = vmatpush1.msra.mxu0 %v1979
    %1981 = vmatprep.subr.mxu0 0.0
    %v1982 = vand.u32 %v516, 4294901760
    %v1983 = vsub.f32 %v516, %v1982
    %v1984 = vand.u32 %v1983, 4294901760
    %v1985 = vsub.f32 %v1983, %v1984
    %v1986 = vand.u32 %v1985, 4294901760
    %1987 = vmatpush1.msra.mxu0 %v1986
    %1988 = vmatprep.subr.mxu0 0.0
    %v1989 = vand.u32 %v515, 4294901760
    %v1990 = vsub.f32 %v515, %v1989
    %v1991 = vand.u32 %v1990, 4294901760
    %v1992 = vsub.f32 %v1990, %v1991
    %v1993 = vand.u32 %v1992, 4294901760
    %1994 = vmatpush1.msra.mxu0 %v1993
    %1995 = vmatprep.subr.mxu0 0.0
    %v1996 = vand.u32 %v514, 4294901760
    %v1997 = vsub.f32 %v514, %v1996
    %v1998 = vand.u32 %v1997, 4294901760
    %v1999 = vsub.f32 %v1997, %v1998
    %v2000 = vand.u32 %v1999, 4294901760
    %2001 = vmatpush1.msra.mxu0 %v2000
    %2002 = vmatprep.subr.mxu0 0.0
    %v2003 = vand.u32 %v513, 4294901760
    %v2004 = vsub.f32 %v513, %v2003
    %v2005 = vand.u32 %v2004, 4294901760
    %v2006 = vsub.f32 %v2004, %v2005
    %v2007 = vand.u32 %v2006, 4294901760
    %2008 = vmatpush1.msra.mxu0 %v2007
    %2009 = vmatprep.subr.mxu0 0.0
    %v2010 = vand.u32 %v512, 4294901760
    %v2011 = vsub.f32 %v512, %v2010
    %v2012 = vand.u32 %v2011, 4294901760
    %v2013 = vsub.f32 %v2011, %v2012
    %v2014 = vand.u32 %v2013, 4294901760
    %2015 = vmatpush1.msra.mxu0 %v2014
    %2016 = vmatprep.subr.mxu0 0.0
    %2017 = vmatpush2.msra.mxu0 0.0
    %2018 = vmatprep.subr.mxu0 0.0
    %2019 = vmatpush2.msra.mxu0 0.0
    %2020 = vmatprep.subr.mxu0 0.0
    %2021 = vmatpush2.msra.mxu0 0.0
    %2022 = vmatprep.subr.mxu0 0.0
    %2023 = vmatpush2.msra.mxu0 0.0
    %2024 = vmatprep.subr.mxu0 0.0
    %2025 = vmatpush2.msra.mxu0 0.0
    %2026 = vmatprep.subr.mxu0 0.0
    %2027 = vmatpush2.msra.mxu0 0.0
    %2028 = vmatprep.subr.mxu0 0.0
    %2029 = vmatpush2.msra.mxu0 0.0
    %2030 = vmatprep.subr.mxu0 0.0
    %2031 = vmatpush2.msra.mxu0 0.0
    %2032 = vmatprep.subr.mxu0 0.0
    %2033 = vmatpush2.msra.mxu0 0.0
    %2034 = vmatprep.subr.mxu0 0.0
    %2035 = vmatpush2.msra.mxu0 0.0
    %2036 = vmatprep.subr.mxu0 0.0
    %2037 = vmatpush2.msra.mxu0 0.0
    %2038 = vmatprep.subr.mxu0 0.0
    %2039 = vmatpush2.msra.mxu0 0.0
    %2040 = vmatprep.subr.mxu0 0.0
    %2041 = vmatpush2.msra.mxu0 0.0
    %2042 = vmatprep.subr.mxu0 0.0
    %2043 = vmatpush2.msra.mxu0 0.0
    %2044 = vmatprep.subr.mxu0 0.0
    %2045 = vmatpush2.msra.mxu0 0.0
    %2046 = vmatprep.subr.mxu0 0.0
    %2047 = vmatpush2.msra.mxu0 0.0
    %2048 = vmatprep.mubr.f32.mxu0 0.0
    %v2049 = vand.u32 %v1812, 4294901760
    %2050 = vmatmul.mubr.f32.gmra.mxu0 %v2049
    %v2051 = vpop.f32.mrf.mxu0
    %v2052 = vadd.f32 %v1901, %v2051
    %v2053 = vpop.f32.mrf.mxu0
    %2054 = vdwg.mxu0
    %2055 = vmatprep.subr.mxu0 0.0
    %v2056 = vand.u32 %v527, 4294901760
    %v2057 = vsub.f32 %v527, %v2056
    %2058 = vmatpush1.msra.mxu0 %v2057
    %2059 = vmatprep.subr.mxu0 0.0
    %v2060 = vand.u32 %v526, 4294901760
    %v2061 = vsub.f32 %v526, %v2060
    %2062 = vmatpush1.msra.mxu0 %v2061
    %2063 = vmatprep.subr.mxu0 0.0
    %v2064 = vand.u32 %v525, 4294901760
    %v2065 = vsub.f32 %v525, %v2064
    %2066 = vmatpush1.msra.mxu0 %v2065
    %2067 = vmatprep.subr.mxu0 0.0
    %v2068 = vand.u32 %v524, 4294901760
    %v2069 = vsub.f32 %v524, %v2068
    %2070 = vmatpush1.msra.mxu0 %v2069
    %2071 = vmatprep.subr.mxu0 0.0
    %v2072 = vand.u32 %v523, 4294901760
    %v2073 = vsub.f32 %v523, %v2072
    %2074 = vmatpush1.msra.mxu0 %v2073
    %2075 = vmatprep.subr.mxu0 0.0
    %v2076 = vand.u32 %v522, 4294901760
    %v2077 = vsub.f32 %v522, %v2076
    %2078 = vmatpush1.msra.mxu0 %v2077
    %2079 = vmatprep.subr.mxu0 0.0
    %v2080 = vand.u32 %v521, 4294901760
    %v2081 = vsub.f32 %v521, %v2080
    %2082 = vmatpush1.msra.mxu0 %v2081
    %2083 = vmatprep.subr.mxu0 0.0
    %v2084 = vand.u32 %v520, 4294901760
    %v2085 = vsub.f32 %v520, %v2084
    %2086 = vmatpush1.msra.mxu0 %v2085
    %2087 = vmatprep.subr.mxu0 0.0
    %v2088 = vand.u32 %v519, 4294901760
    %v2089 = vsub.f32 %v519, %v2088
    %2090 = vmatpush1.msra.mxu0 %v2089
    %2091 = vmatprep.subr.mxu0 0.0
    %v2092 = vand.u32 %v518, 4294901760
    %v2093 = vsub.f32 %v518, %v2092
    %2094 = vmatpush1.msra.mxu0 %v2093
    %2095 = vmatprep.subr.mxu0 0.0
    %v2096 = vand.u32 %v517, 4294901760
    %v2097 = vsub.f32 %v517, %v2096
    %2098 = vmatpush1.msra.mxu0 %v2097
    %2099 = vmatprep.subr.mxu0 0.0
    %v2100 = vand.u32 %v516, 4294901760
    %v2101 = vsub.f32 %v516, %v2100
    %2102 = vmatpush1.msra.mxu0 %v2101
    %2103 = vmatprep.subr.mxu0 0.0
    %v2104 = vand.u32 %v515, 4294901760
    %v2105 = vsub.f32 %v515, %v2104
    %2106 = vmatpush1.msra.mxu0 %v2105
    %2107 = vmatprep.subr.mxu0 0.0
    %v2108 = vand.u32 %v514, 4294901760
    %v2109 = vsub.f32 %v514, %v2108
    %2110 = vmatpush1.msra.mxu0 %v2109
    %2111 = vmatprep.subr.mxu0 0.0
    %v2112 = vand.u32 %v513, 4294901760
    %v2113 = vsub.f32 %v513, %v2112
    %2114 = vmatpush1.msra.mxu0 %v2113
    %2115 = vmatprep.subr.mxu0 0.0
    %v2116 = vand.u32 %v512, 4294901760
    %v2117 = vsub.f32 %v512, %v2116
    %2118 = vmatpush1.msra.mxu0 %v2117
    %2119 = vmatprep.subr.mxu0 0.0
    %2120 = vmatpush2.msra.mxu0 0.0
    %2121 = vmatprep.subr.mxu0 0.0
    %2122 = vmatpush2.msra.mxu0 0.0
    %2123 = vmatprep.subr.mxu0 0.0
    %2124 = vmatpush2.msra.mxu0 0.0
    %2125 = vmatprep.subr.mxu0 0.0
    %2126 = vmatpush2.msra.mxu0 0.0
    %2127 = vmatprep.subr.mxu0 0.0
    %2128 = vmatpush2.msra.mxu0 0.0
    %2129 = vmatprep.subr.mxu0 0.0
    %2130 = vmatpush2.msra.mxu0 0.0
    %2131 = vmatprep.subr.mxu0 0.0
    %2132 = vmatpush2.msra.mxu0 0.0
    %2133 = vmatprep.subr.mxu0 0.0
    %2134 = vmatpush2.msra.mxu0 0.0
    %2135 = vmatprep.subr.mxu0 0.0
    %2136 = vmatpush2.msra.mxu0 0.0
    %2137 = vmatprep.subr.mxu0 0.0
    %2138 = vmatpush2.msra.mxu0 0.0
    %2139 = vmatprep.subr.mxu0 0.0
    %2140 = vmatpush2.msra.mxu0 0.0
    %2141 = vmatprep.subr.mxu0 0.0
    %2142 = vmatpush2.msra.mxu0 0.0
    %2143 = vmatprep.subr.mxu0 0.0
    %2144 = vmatpush2.msra.mxu0 0.0
    %2145 = vmatprep.subr.mxu0 0.0
    %2146 = vmatpush2.msra.mxu0 0.0
    %2147 = vmatprep.subr.mxu0 0.0
    %2148 = vmatpush2.msra.mxu0 0.0
    %2149 = vmatprep.subr.mxu0 0.0
    %2150 = vmatpush2.msra.mxu0 0.0
    %2151 = vmatprep.mubr.f32.mxu0 0.0
    %v2152 = vand.u32 %v1812, 4294901760
    %v2153 = vsub.f32 %v1812, %v2152
    %2154 = vmatmul.mubr.f32.gmra.mxu0 %v2153
    %v2155 = vpop.f32.mrf.mxu0
    %v2156 = vadd.f32 %v2052, %v2155
    %v2157 = vpop.f32.mrf.mxu0
    %2158 = vdwg.mxu0
    %2159 = vmatprep.subr.mxu0 0.0
    %v2160 = vand.u32 %v527, 4294901760
    %2161 = vmatpush1.msra.mxu0 %v2160
    %2162 = vmatprep.subr.mxu0 0.0
    %v2163 = vand.u32 %v526, 4294901760
    %2164 = vmatpush1.msra.mxu0 %v2163
    %2165 = vmatprep.subr.mxu0 0.0
    %v2166 = vand.u32 %v525, 4294901760
    %2167 = vmatpush1.msra.mxu0 %v2166
    %2168 = vmatprep.subr.mxu0 0.0
    %v2169 = vand.u32 %v524, 4294901760
    %2170 = vmatpush1.msra.mxu0 %v2169
    %2171 = vmatprep.subr.mxu0 0.0
    %v2172 = vand.u32 %v523, 4294901760
    %2173 = vmatpush1.msra.mxu0 %v2172
    %2174 = vmatprep.subr.mxu0 0.0
    %v2175 = vand.u32 %v522, 4294901760
    %2176 = vmatpush1.msra.mxu0 %v2175
    %2177 = vmatprep.subr.mxu0 0.0
    %v2178 = vand.u32 %v521, 4294901760
    %2179 = vmatpush1.msra.mxu0 %v2178
    %2180 = vmatprep.subr.mxu0 0.0
    %v2181 = vand.u32 %v520, 4294901760
    %2182 = vmatpush1.msra.mxu0 %v2181
    %2183 = vmatprep.subr.mxu0 0.0
    %v2184 = vand.u32 %v519, 4294901760
    %2185 = vmatpush1.msra.mxu0 %v2184
    %2186 = vmatprep.subr.mxu0 0.0
    %v2187 = vand.u32 %v518, 4294901760
    %2188 = vmatpush1.msra.mxu0 %v2187
    %2189 = vmatprep.subr.mxu0 0.0
    %v2190 = vand.u32 %v517, 4294901760
    %2191 = vmatpush1.msra.mxu0 %v2190
    %2192 = vmatprep.subr.mxu0 0.0
    %v2193 = vand.u32 %v516, 4294901760
    %2194 = vmatpush1.msra.mxu0 %v2193
    %2195 = vmatprep.subr.mxu0 0.0
    %v2196 = vand.u32 %v515, 4294901760
    %2197 = vmatpush1.msra.mxu0 %v2196
    %2198 = vmatprep.subr.mxu0 0.0
    %v2199 = vand.u32 %v514, 4294901760
    %2200 = vmatpush1.msra.mxu0 %v2199
    %2201 = vmatprep.subr.mxu0 0.0
    %v2202 = vand.u32 %v513, 4294901760
    %2203 = vmatpush1.msra.mxu0 %v2202
    %2204 = vmatprep.subr.mxu0 0.0
    %v2205 = vand.u32 %v512, 4294901760
    %2206 = vmatpush1.msra.mxu0 %v2205
    %2207 = vmatprep.subr.mxu0 0.0
    %2208 = vmatpush2.msra.mxu0 0.0
    %2209 = vmatprep.subr.mxu0 0.0
    %2210 = vmatpush2.msra.mxu0 0.0
    %2211 = vmatprep.subr.mxu0 0.0
    %2212 = vmatpush2.msra.mxu0 0.0
    %2213 = vmatprep.subr.mxu0 0.0
    %2214 = vmatpush2.msra.mxu0 0.0
    %2215 = vmatprep.subr.mxu0 0.0
    %2216 = vmatpush2.msra.mxu0 0.0
    %2217 = vmatprep.subr.mxu0 0.0
    %2218 = vmatpush2.msra.mxu0 0.0
    %2219 = vmatprep.subr.mxu0 0.0
    %2220 = vmatpush2.msra.mxu0 0.0
    %2221 = vmatprep.subr.mxu0 0.0
    %2222 = vmatpush2.msra.mxu0 0.0
    %2223 = vmatprep.subr.mxu0 0.0
    %2224 = vmatpush2.msra.mxu0 0.0
    %2225 = vmatprep.subr.mxu0 0.0
    %2226 = vmatpush2.msra.mxu0 0.0
    %2227 = vmatprep.subr.mxu0 0.0
    %2228 = vmatpush2.msra.mxu0 0.0
    %2229 = vmatprep.subr.mxu0 0.0
    %2230 = vmatpush2.msra.mxu0 0.0
    %2231 = vmatprep.subr.mxu0 0.0
    %2232 = vmatpush2.msra.mxu0 0.0
    %2233 = vmatprep.subr.mxu0 0.0
    %2234 = vmatpush2.msra.mxu0 0.0
    %2235 = vmatprep.subr.mxu0 0.0
    %2236 = vmatpush2.msra.mxu0 0.0
    %2237 = vmatprep.subr.mxu0 0.0
    %2238 = vmatpush2.msra.mxu0 0.0
    %2239 = vmatprep.mubr.f32.mxu0 0.0
    %v2240 = vand.u32 %v1812, 4294901760
    %v2241 = vsub.f32 %v1812, %v2240
    %v2242 = vand.u32 %v2241, 4294901760
    %2243 = vmatmul.mubr.f32.gmra.mxu0 %v2242
    %v2244 = vpop.f32.mrf.mxu0
    %v2245 = vadd.f32 %v2156, %v2244
    %v2246 = vpop.f32.mrf.mxu0
    %2247 = vdwg.mxu0
    %2248 = vmatprep.subr.mxu0 0.0
    %v2249 = vand.u32 %v527, 4294901760
    %v2250 = vsub.f32 %v527, %v2249
    %v2251 = vand.u32 %v2250, 4294901760
    %2252 = vmatpush1.msra.mxu0 %v2251
    %2253 = vmatprep.subr.mxu0 0.0
    %v2254 = vand.u32 %v526, 4294901760
    %v2255 = vsub.f32 %v526, %v2254
    %v2256 = vand.u32 %v2255, 4294901760
    %2257 = vmatpush1.msra.mxu0 %v2256
    %2258 = vmatprep.subr.mxu0 0.0
    %v2259 = vand.u32 %v525, 4294901760
    %v2260 = vsub.f32 %v525, %v2259
    %v2261 = vand.u32 %v2260, 4294901760
    %2262 = vmatpush1.msra.mxu0 %v2261
    %2263 = vmatprep.subr.mxu0 0.0
    %v2264 = vand.u32 %v524, 4294901760
    %v2265 = vsub.f32 %v524, %v2264
    %v2266 = vand.u32 %v2265, 4294901760
    %2267 = vmatpush1.msra.mxu0 %v2266
    %2268 = vmatprep.subr.mxu0 0.0
    %v2269 = vand.u32 %v523, 4294901760
    %v2270 = vsub.f32 %v523, %v2269
    %v2271 = vand.u32 %v2270, 4294901760
    %2272 = vmatpush1.msra.mxu0 %v2271
    %2273 = vmatprep.subr.mxu0 0.0
    %v2274 = vand.u32 %v522, 4294901760
    %v2275 = vsub.f32 %v522, %v2274
    %v2276 = vand.u32 %v2275, 4294901760
    %2277 = vmatpush1.msra.mxu0 %v2276
    %2278 = vmatprep.subr.mxu0 0.0
    %v2279 = vand.u32 %v521, 4294901760
    %v2280 = vsub.f32 %v521, %v2279
    %v2281 = vand.u32 %v2280, 4294901760
    %2282 = vmatpush1.msra.mxu0 %v2281
    %2283 = vmatprep.subr.mxu0 0.0
    %v2284 = vand.u32 %v520, 4294901760
    %v2285 = vsub.f32 %v520, %v2284
    %v2286 = vand.u32 %v2285, 4294901760
    %2287 = vmatpush1.msra.mxu0 %v2286
    %2288 = vmatprep.subr.mxu0 0.0
    %v2289 = vand.u32 %v519, 4294901760
    %v2290 = vsub.f32 %v519, %v2289
    %v2291 = vand.u32 %v2290, 4294901760
    %2292 = vmatpush1.msra.mxu0 %v2291
    %2293 = vmatprep.subr.mxu0 0.0
    %v2294 = vand.u32 %v518, 4294901760
    %v2295 = vsub.f32 %v518, %v2294
    %v2296 = vand.u32 %v2295, 4294901760
    %2297 = vmatpush1.msra.mxu0 %v2296
    %2298 = vmatprep.subr.mxu0 0.0
    %v2299 = vand.u32 %v517, 4294901760
    %v2300 = vsub.f32 %v517, %v2299
    %v2301 = vand.u32 %v2300, 4294901760
    %2302 = vmatpush1.msra.mxu0 %v2301
    %2303 = vmatprep.subr.mxu0 0.0
    %v2304 = vand.u32 %v516, 4294901760
    %v2305 = vsub.f32 %v516, %v2304
    %v2306 = vand.u32 %v2305, 4294901760
    %2307 = vmatpush1.msra.mxu0 %v2306
    %2308 = vmatprep.subr.mxu0 0.0
    %v2309 = vand.u32 %v515, 4294901760
    %v2310 = vsub.f32 %v515, %v2309
    %v2311 = vand.u32 %v2310, 4294901760
    %2312 = vmatpush1.msra.mxu0 %v2311
    %2313 = vmatprep.subr.mxu0 0.0
    %v2314 = vand.u32 %v514, 4294901760
    %v2315 = vsub.f32 %v514, %v2314
    %v2316 = vand.u32 %v2315, 4294901760
    %2317 = vmatpush1.msra.mxu0 %v2316
    %2318 = vmatprep.subr.mxu0 0.0
    %v2319 = vand.u32 %v513, 4294901760
    %v2320 = vsub.f32 %v513, %v2319
    %v2321 = vand.u32 %v2320, 4294901760
    %2322 = vmatpush1.msra.mxu0 %v2321
    %2323 = vmatprep.subr.mxu0 0.0
    %v2324 = vand.u32 %v512, 4294901760
    %v2325 = vsub.f32 %v512, %v2324
    %v2326 = vand.u32 %v2325, 4294901760
    %2327 = vmatpush1.msra.mxu0 %v2326
    %2328 = vmatprep.subr.mxu0 0.0
    %2329 = vmatpush2.msra.mxu0 0.0
    %2330 = vmatprep.subr.mxu0 0.0
    %2331 = vmatpush2.msra.mxu0 0.0
    %2332 = vmatprep.subr.mxu0 0.0
    %2333 = vmatpush2.msra.mxu0 0.0
    %2334 = vmatprep.subr.mxu0 0.0
    %2335 = vmatpush2.msra.mxu0 0.0
    %2336 = vmatprep.subr.mxu0 0.0
    %2337 = vmatpush2.msra.mxu0 0.0
    %2338 = vmatprep.subr.mxu0 0.0
    %2339 = vmatpush2.msra.mxu0 0.0
    %2340 = vmatprep.subr.mxu0 0.0
    %2341 = vmatpush2.msra.mxu0 0.0
    %2342 = vmatprep.subr.mxu0 0.0
    %2343 = vmatpush2.msra.mxu0 0.0
    %2344 = vmatprep.subr.mxu0 0.0
    %2345 = vmatpush2.msra.mxu0 0.0
    %2346 = vmatprep.subr.mxu0 0.0
    %2347 = vmatpush2.msra.mxu0 0.0
    %2348 = vmatprep.subr.mxu0 0.0
    %2349 = vmatpush2.msra.mxu0 0.0
    %2350 = vmatprep.subr.mxu0 0.0
    %2351 = vmatpush2.msra.mxu0 0.0
    %2352 = vmatprep.subr.mxu0 0.0
    %2353 = vmatpush2.msra.mxu0 0.0
    %2354 = vmatprep.subr.mxu0 0.0
    %2355 = vmatpush2.msra.mxu0 0.0
    %2356 = vmatprep.subr.mxu0 0.0
    %2357 = vmatpush2.msra.mxu0 0.0
    %2358 = vmatprep.subr.mxu0 0.0
    %2359 = vmatpush2.msra.mxu0 0.0
    %2360 = vmatprep.mubr.f32.mxu0 0.0
    %v2361 = vand.u32 %v1812, 4294901760
    %2362 = vmatmul.mubr.f32.gmra.mxu0 %v2361
    %v2363 = vpop.f32.mrf.mxu0
    %v2364 = vadd.f32 %v2245, %v2363
    %v2365 = vpop.f32.mrf.mxu0
    %2366 = vdwg.mxu0
    %2367 = vmatprep.subr.mxu0 0.0
    %v2368 = vand.u32 %v527, 4294901760
    %2369 = vmatpush1.msra.mxu0 %v2368
    %2370 = vmatprep.subr.mxu0 0.0
    %v2371 = vand.u32 %v526, 4294901760
    %2372 = vmatpush1.msra.mxu0 %v2371
    %2373 = vmatprep.subr.mxu0 0.0
    %v2374 = vand.u32 %v525, 4294901760
    %2375 = vmatpush1.msra.mxu0 %v2374
    %2376 = vmatprep.subr.mxu0 0.0
    %v2377 = vand.u32 %v524, 4294901760
    %2378 = vmatpush1.msra.mxu0 %v2377
    %2379 = vmatprep.subr.mxu0 0.0
    %v2380 = vand.u32 %v523, 4294901760
    %2381 = vmatpush1.msra.mxu0 %v2380
    %2382 = vmatprep.subr.mxu0 0.0
    %v2383 = vand.u32 %v522, 4294901760
    %2384 = vmatpush1.msra.mxu0 %v2383
    %2385 = vmatprep.subr.mxu0 0.0
    %v2386 = vand.u32 %v521, 4294901760
    %2387 = vmatpush1.msra.mxu0 %v2386
    %2388 = vmatprep.subr.mxu0 0.0
    %v2389 = vand.u32 %v520, 4294901760
    %2390 = vmatpush1.msra.mxu0 %v2389
    %2391 = vmatprep.subr.mxu0 0.0
    %v2392 = vand.u32 %v519, 4294901760
    %2393 = vmatpush1.msra.mxu0 %v2392
    %2394 = vmatprep.subr.mxu0 0.0
    %v2395 = vand.u32 %v518, 4294901760
    %2396 = vmatpush1.msra.mxu0 %v2395
    %2397 = vmatprep.subr.mxu0 0.0
    %v2398 = vand.u32 %v517, 4294901760
    %2399 = vmatpush1.msra.mxu0 %v2398
    %2400 = vmatprep.subr.mxu0 0.0
    %v2401 = vand.u32 %v516, 4294901760
    %2402 = vmatpush1.msra.mxu0 %v2401
    %2403 = vmatprep.subr.mxu0 0.0
    %v2404 = vand.u32 %v515, 4294901760
    %2405 = vmatpush1.msra.mxu0 %v2404
    %2406 = vmatprep.subr.mxu0 0.0
    %v2407 = vand.u32 %v514, 4294901760
    %2408 = vmatpush1.msra.mxu0 %v2407
    %2409 = vmatprep.subr.mxu0 0.0
    %v2410 = vand.u32 %v513, 4294901760
    %2411 = vmatpush1.msra.mxu0 %v2410
    %2412 = vmatprep.subr.mxu0 0.0
    %v2413 = vand.u32 %v512, 4294901760
    %2414 = vmatpush1.msra.mxu0 %v2413
    %2415 = vmatprep.subr.mxu0 0.0
    %2416 = vmatpush2.msra.mxu0 0.0
    %2417 = vmatprep.subr.mxu0 0.0
    %2418 = vmatpush2.msra.mxu0 0.0
    %2419 = vmatprep.subr.mxu0 0.0
    %2420 = vmatpush2.msra.mxu0 0.0
    %2421 = vmatprep.subr.mxu0 0.0
    %2422 = vmatpush2.msra.mxu0 0.0
    %2423 = vmatprep.subr.mxu0 0.0
    %2424 = vmatpush2.msra.mxu0 0.0
    %2425 = vmatprep.subr.mxu0 0.0
    %2426 = vmatpush2.msra.mxu0 0.0
    %2427 = vmatprep.subr.mxu0 0.0
    %2428 = vmatpush2.msra.mxu0 0.0
    %2429 = vmatprep.subr.mxu0 0.0
    %2430 = vmatpush2.msra.mxu0 0.0
    %2431 = vmatprep.subr.mxu0 0.0
    %2432 = vmatpush2.msra.mxu0 0.0
    %2433 = vmatprep.subr.mxu0 0.0
    %2434 = vmatpush2.msra.mxu0 0.0
    %2435 = vmatprep.subr.mxu0 0.0
    %2436 = vmatpush2.msra.mxu0 0.0
    %2437 = vmatprep.subr.mxu0 0.0
    %2438 = vmatpush2.msra.mxu0 0.0
    %2439 = vmatprep.subr.mxu0 0.0
    %2440 = vmatpush2.msra.mxu0 0.0
    %2441 = vmatprep.subr.mxu0 0.0
    %2442 = vmatpush2.msra.mxu0 0.0
    %2443 = vmatprep.subr.mxu0 0.0
    %2444 = vmatpush2.msra.mxu0 0.0
    %2445 = vmatprep.subr.mxu0 0.0
    %2446 = vmatpush2.msra.mxu0 0.0
    %2447 = vmatprep.mubr.f32.mxu0 0.0
    %v2448 = vand.u32 %v1812, 4294901760
    %2449 = vmatmul.mubr.f32.gmra.mxu0 %v2448
    %v2450 = vpop.f32.mrf.mxu0
    %v2451 = vadd.f32 %v2364, %v2450
    %v2452 = vpop.f32.mrf.mxu0
    %2453 = vdwg.mxu0
    %v2454 = vsel %vm421, 1, 0
    %v2455 = vcvt.s32.f32 %v2454
    %v2456 = vsub.f32 %v1808, %v508
    %v2457 = vmax.f32 %v1166, 1e-37
    %v2458 = vlog2.pop %v2457
    %v2459 = vmul.f32 %v2458, 0.6931472
    %v2460 = vsub.f32 %v2456, %v2459
    %v2461 = vmul.f32 %v2460, %v2455
    %2462 = vadd.xlane.f32.xlu0 %v2461
    %v2463 = vpop.xlane.xlu0 %2462
    %v2464 = vld [vmem:[%s11] sm:$0x1]
    %v2466 = vlaneseq
    %v2467 = vshrl.u32 %v2466, 7
    %v2468 = vsub.s32 0, %v2467
    %v2469 = vrot.slane %v2464, %v2468
    %v2471 = vsub.f32 %v2451, %v2469
    %vm2472 = vcmp.eq.s32.totalorder %v391, 3
    %v2473 = vsel %vm2472, 1, 0
    %v2474 = vcvt.s32.f32 %v2473
    %v2475 = vmul.f32 %v2471, %v2455
    %v2476 = vmul.f32 %v2463, %v2474
    %v2477 = vadd.f32 %v2475, %v2476
    %2478 = vst [vmem:[#allocation15] sm:$0xff] %v2477
    // Predicated region
    $region70: #{tpu_custom_call.1} parent=1 // pred_check
      _
    $region71: #{tpu_custom_call.1} parent=1 // pred_check_branch
      %2480 = sbr.rel (0) target = $region73
    $region72: #{tpu_custom_call.1} parent=1 // pred_region
      %s2482 = ssub.s32 128, 128
      %2483 = vsyncadd [#allocation6], %s2482
      %s2485 = sshll.u32 [#allocation15], 4
      %s2486 = int_to_ptr.vmem [resolvable:$true] %s2485
      %2488 = dma.vmem_to_hbm [thread:$0]  %s2486, 128, %s12, [#allocation6]
    $region73: #{tpu_custom_call.1} parent=1 // pred_fallthru
      _
    // Predicated region
    $region74: #{tpu_custom_call.1} parent=1 // pred_check
      _
    $region75: #{tpu_custom_call.1} parent=1 // pred_check_branch
      %2490 = sbr.rel (0) target = $region77
    $region76: #{tpu_custom_call.1} parent=1 // pred_region
      %2491 = dma.done [#allocation6], 128
    $region77: #{tpu_custom_call.1} parent=1 // pred_fallthru
      _
    %2492 = vsyncpa [#allocation5], 1
    %2493 = vsyncpa [#allocation8], 1
    %2494 = vsyncpa [#allocation11], 1
    %2495 = vsyncpa [#allocation14], 1
    %2496 = vsyncpa [#allocation6], 1

</llo_original>
